<compile_context>
chip_gen: v5e
topology: v5e:2x2
jax: 0.10.0
libtpu: 0.0.40
codegen_flags: <defaults>
</compile_context>

<pallas_src>
import functools

import jax
import jax.numpy as jnp
from jax.experimental import pallas as pl
from jax.experimental.pallas import tpu as pltpu

EPS = 1e-5  # nn.BatchNorm2d default eps


def _upsample_block_kernel(H2, W2,
                           x1u_ref, x2_ref, row_ref, col_ref, quad_ref,
                           wt_ref, bt_ref,
                           wa_ref, bs_ref, g1_ref, be1_ref,
                           w2_ref, g2_ref, be2_ref,
                           w3_ref, g3_ref, be3_ref,
                           o_ref):
    _, N = x1u_ref.shape
    Cl = w2_ref.shape[0]             # low_channels = output_channels // 4
    inv_n = 1.0 / N

    def bn(z, g_ref, be_ref, relu):
        # Training-mode BatchNorm2d (biased variance) fused into a single FMA;
        # statistics are lane (pixel-axis) reductions -> XLU.
        mu = jnp.sum(z, axis=1, keepdims=True) * inv_n
        var = jnp.sum(z * z, axis=1, keepdims=True) * inv_n - mu * mu
        scale = g_ref[...] * jax.lax.rsqrt(var + EPS)
        shift = be_ref[...] - mu * scale
        y = z * scale + shift
        return jnp.maximum(y, 0.0) if relu else y

    row = row_ref[...]               # (1, N) i32: full-res row index i2
    col = col_ref[...]               # (1, N) i32: full-res col index j2
    quad = quad_ref[...]             # (1, N) i32: 2*(i2 % 2) + (j2 % 2)

    # --- ConvTranspose2d(Cin -> Cout, k=2, s=2): ONE K=4*Cin matmul over
    #     parity-masked taps of the nearest-replicated input.  Trades 4x
    #     redundant MACs on this small matmul for a fully lane-dense,
    #     interleave-free layout.
    # TODO(synk): at production sizes recover the 4x via a compact-N1 matmul +
    # strided-store interleave (sublane axis) instead of the masked taps.
    x1u = x1u_ref[...]
    taps = [jnp.where(quad == q, x1u, 0.0) for q in range(4)]
    up = jnp.dot(wt_ref[...], jnp.concatenate(taps, axis=0),
                 preferred_element_type=jnp.float32) + bt_ref[...]

    # --- channel concat [skip, upsampled] -> bottleneck input (Cin, N) ---
    x = jnp.concatenate([x2_ref[...], up], axis=0)

    # --- conv1 (1x1 -> Cl) and conv_side (1x1 -> Cout) fused into one matmul ---
    z = jnp.dot(wa_ref[...], x, preferred_element_type=jnp.float32)
    y1 = bn(z[:Cl], g1_ref, be1_ref, relu=True)          # (Cl, N)
    side = z[Cl:] + bs_ref[...]                          # (Cout, N), no BN

    # --- conv2: 3x3, pad=1, as ONE im2col matmul (K = 9*Cl) ---
    cols = []
    for dy in (-1, 0, 1):
        ok_i = jnp.logical_and(row + dy >= 0, row + dy < H2)
        for dx in (-1, 0, 1):
            ok = jnp.logical_and(
                ok_i, jnp.logical_and(col + dx >= 0, col + dx < W2))
            s = dy * W2 + dx
            shifted = pltpu.roll(y1, shift=(-s) % N, axis=1) if s else y1
            cols.append(jnp.where(ok, shifted, 0.0))
    z2 = jnp.dot(w2_ref[...], jnp.concatenate(cols, axis=0),
                 preferred_element_type=jnp.float32)
    y2 = bn(z2, g2_ref, be2_ref, relu=True)              # (Cl, N)

    # --- conv3 (1x1 -> Cout) + BN, residual add with side branch, relu ---
    y3 = bn(jnp.dot(w3_ref[...], y2, preferred_element_type=jnp.float32),
            g3_ref, be3_ref, relu=False)
    o_ref[...] = jnp.maximum(side + y3, 0.0)


def _flatten_nchw(a):
    # (B, C, H, W) -> (C, B*H*W): channels on sublanes, pixels on lanes.
    B, C, H, W = a.shape
    return jnp.transpose(a, (1, 0, 2, 3)).reshape(C, B * H * W)


@jax.jit
def upsample_block(x1, x2, params):
    """UpSampleBlock forward (mode='Transposed', BN=True).  NCHW in / NCHW out."""
    # TODO(synk): mode != 'Transposed' (nn.Upsample) and BN=False config branches
    # are not implemented; this is the module's default configuration.
    x1 = x1.astype(jnp.float32)
    x2 = x2.astype(jnp.float32)
    B, Cin, H1, W1 = x1.shape
    _, Cskip, H2, W2 = x2.shape
    Cout = params["w3"].shape[0]
    Cl = params["w2"].shape[0]
    N = B * H2 * W2
    assert H2 == 2 * H1 and W2 == 2 * W1 and Cskip + Cout == Cin and Cin != Cout

    # Layout plumbing only (no arithmetic): nearest-replicate x1 to full
    # resolution and flatten everything to the (C, N) kernel layout.
    x1u = _flatten_nchw(jnp.repeat(jnp.repeat(x1, 2, axis=2), 2, axis=3))
    x2f = _flatten_nchw(x2)

    # Pixel-coordinate vectors (built once here; only compared inside the kernel).
    flat = jnp.arange(N, dtype=jnp.int32)
    j2 = flat % W2
    i2 = (flat // W2) % H2
    row = i2.reshape(1, N)
    col = j2.reshape(1, N)
    quad = (2 * (i2 % 2) + (j2 % 2)).reshape(1, N)

    # Weight repacking into the fused, (C_out, K)-oriented kernel layouts.
    wt_cat = jnp.transpose(params["wt"], (1, 2, 3, 0)).reshape(Cout, 4 * Cin)
    bt = params["bt"].reshape(Cout, 1)
    wa = jnp.concatenate([params["w1"], params["ws"]], axis=0)      # (Cl+Cout, Cin)
    bs = params["bs"].reshape(Cout, 1)
    w2c = jnp.transpose(params["w2"], (0, 2, 3, 1)).reshape(Cl, 9 * Cl)
    w3 = params["w3"]                                               # (Cout, Cl)
    g1, be1 = params["g1"].reshape(Cl, 1), params["be1"].reshape(Cl, 1)
    g2, be2 = params["g2"].reshape(Cl, 1), params["be2"].reshape(Cl, 1)
    g3, be3 = params["g3"].reshape(Cout, 1), params["be3"].reshape(Cout, 1)
    # NOTE: conv biases b1/b2/b3 are intentionally NOT passed to the kernel --
    # a per-channel constant added before training-mode BatchNorm is exactly
    # cancelled by the mean subtraction (the reference keeps them).

    args = (x1u, x2f, row, col, quad, wt_cat, bt, wa, bs, g1, be1,
            w2c, g2, be2, w3, g3, be3)
    vmem = pl.BlockSpec(memory_space=pltpu.MemorySpace.VMEM)

    # TODO(synk): for production-sized B*H*W, tile the pixel axis with a grid
    # (two-pass BN: stats via a cross-grid accumulator on an 'arbitrary' axis)
    # so the working set fits v7x's 64 MiB VMEM and the pixel axis can be marked
    # 'parallel' for its two TensorCores.  At these shapes (~3 MiB total) the
    # monolithic single-invocation kernel is correct and fastest.
    out_flat = pl.pallas_call(
        functools.partial(_upsample_block_kernel, H2, W2),
        out_shape=jax.ShapeDtypeStruct((Cout, N), jnp.float32),
        in_specs=[vmem] * len(args),
        out_specs=vmem,
        compiler_params=pltpu.CompilerParams(vmem_limit_bytes=32 * 1024 * 1024),
    )(*args)

    return jnp.transpose(out_flat.reshape(Cout, B, H2, W2), (1, 0, 2, 3))


def init_params(key, in_channels, out_channels):
    """Deterministic synthetic parameters in PyTorch-native shapes."""
    low = out_channels // 4
    ks = jax.random.split(key, 16)
    w = lambda k, s, scale=0.2: scale * jax.random.normal(k, s, jnp.float32)
    return dict(
        # ConvTranspose2d(in, out, k=2, s=2): weight (Cin, Cout, 2, 2)
        wt=w(ks[0], (in_channels, out_channels, 2, 2)), bt=w(ks[1], (out_channels,), 0.1),
        # conv1: 1x1, Cin -> low
        w1=w(ks[2], (low, in_channels)), b1=w(ks[3], (low,), 0.1),
        g1=1.0 + w(ks[4], (low,), 0.1), be1=w(ks[5], (low,), 0.1),
        # conv2: 3x3, low -> low
        w2=w(ks[6], (low, low, 3, 3)), b2=w(ks[7], (low,), 0.1),
        g2=1.0 + w(ks[8], (low,), 0.1), be2=w(ks[9], (low,), 0.1),
        # conv3: 1x1, low -> Cout
        w3=w(ks[10], (out_channels, low)), b3=w(ks[11], (out_channels,), 0.1),
        g3=1.0 + w(ks[12], (out_channels,), 0.1), be3=w(ks[13], (out_channels,), 0.1),
        # conv_side: 1x1, Cin -> Cout (no BN)
        ws=w(ks[14], (out_channels, in_channels)), bs=w(ks[15], (out_channels,), 0.1),
    )


def reference(x1, x2, p):
    """Pure-JAX reference of the PyTorch UpSampleBlock forward (NCHW in/out)."""
    hi = jax.lax.Precision.HIGHEST
    x1 = x1.astype(jnp.float32)
    x2 = x2.astype(jnp.float32)
    B, _, H1, W1 = x1.shape
    Cout = p["w3"].shape[0]
    H2, W2 = 2 * H1, 2 * W1

    # ConvTranspose2d(kernel=2, stride=2)
    up = jnp.einsum("bcij,cokl->boikjl", x1, p["wt"], precision=hi)
    up = up.reshape(B, Cout, H2, W2) + p["bt"][None, :, None, None]
    x = jnp.concatenate([x2, up], axis=1)

    def bn(z, g, be):
        mu = jnp.mean(z, axis=(0, 2, 3), keepdims=True)
        var = jnp.mean(jnp.square(z - mu), axis=(0, 2, 3), keepdims=True)
        return ((z - mu) / jnp.sqrt(var + EPS) * g[None, :, None, None]
                + be[None, :, None, None])

    def c1x1(a, w, b):
        return jnp.einsum("bchw,oc->bohw", a, w, precision=hi) + b[None, :, None, None]

    y = jax.nn.relu(bn(c1x1(x, p["w1"], p["b1"]), p["g1"], p["be1"]))
    yp = jnp.pad(y, ((0, 0), (0, 0), (1, 1), (1, 1)))
    z2 = p["b2"][None, :, None, None] + sum(
        jnp.einsum("bchw,oc->bohw", yp[:, :, ky:ky + H2, kx:kx + W2],
                   p["w2"][:, :, ky, kx], precision=hi)
        for ky in range(3) for kx in range(3))
    y = jax.nn.relu(bn(z2, p["g2"], p["be2"]))
    y = bn(c1x1(y, p["w3"], p["b3"]), p["g3"], p["be3"])
    side = c1x1(x, p["ws"], p["bs"])            # input_channels != output_channels
    return jax.nn.relu(side + y)


if __name__ == "__main__":
    # U-Net style shapes: deep features x1 get upsampled 2x and concatenated with
    # the skip connection x2; Cskip + Cout must equal the block's in_channels.
    B, Cin, Cout = 2, 64, 32
    H1 = W1 = 8
    Cskip = Cin - Cout

    key = jax.random.PRNGKey(0)
    k1, k2, kp = jax.random.split(key, 3)
    x1 = jax.random.normal(k1, (B, Cin, H1, W1), jnp.float32)          # NCHW
    x2 = jax.random.normal(k2, (B, Cskip, 2 * H1, 2 * W1), jnp.float32)  # NCHW skip
    params = init_params(kp, Cin, Cout)

    out = jax.block_until_ready(upsample_block(x1, x2, params))
    assert out.shape == (B, Cout, 2 * H1, 2 * W1), out.shape

    ref = reference(x1, x2, params)
    if not jnp.allclose(out, ref, rtol=5e-3, atol=5e-3):
        raise AssertionError(
            f"kernel/reference mismatch: max abs err {jnp.max(jnp.abs(out - ref))}")
    print("KERNEL_OK")
</pallas_src>

<mosaic_0001>
module attributes {stable_mosaic.version = 11 : i64} {
  func.func @_upsample_block_kernel(%arg0: memref<64x512xf32, #tpu.memory_space<vmem>>, %arg1: memref<32x512xf32, #tpu.memory_space<vmem>>, %arg2: memref<1x512xi32, #tpu.memory_space<vmem>>, %arg3: memref<1x512xi32, #tpu.memory_space<vmem>>, %arg4: memref<1x512xi32, #tpu.memory_space<vmem>>, %arg5: memref<32x256xf32, #tpu.memory_space<vmem>>, %arg6: memref<32x1xf32, #tpu.memory_space<vmem>>, %arg7: memref<40x64xf32, #tpu.memory_space<vmem>>, %arg8: memref<32x1xf32, #tpu.memory_space<vmem>>, %arg9: memref<8x1xf32, #tpu.memory_space<vmem>>, %arg10: memref<8x1xf32, #tpu.memory_space<vmem>>, %arg11: memref<8x72xf32, #tpu.memory_space<vmem>>, %arg12: memref<8x1xf32, #tpu.memory_space<vmem>>, %arg13: memref<8x1xf32, #tpu.memory_space<vmem>>, %arg14: memref<32x8xf32, #tpu.memory_space<vmem>>, %arg15: memref<32x1xf32, #tpu.memory_space<vmem>>, %arg16: memref<32x1xf32, #tpu.memory_space<vmem>>, %arg17: memref<32x512xf32, #tpu.memory_space<vmem>>) attributes {dimension_semantics = [], scalar_prefetch = 0 : i64, scratch_operands = 0 : i64, tpu.core_type = #tpu.core_type<tc>} {
    %c0 = arith.constant 0 : index
    %c0_0 = arith.constant 0 : index
    %0 = vector.load %arg2[%c0, %c0_0] : memref<1x512xi32, #tpu.memory_space<vmem>>, vector<1x512xi32>
    %c0_1 = arith.constant 0 : index
    %c0_2 = arith.constant 0 : index
    %1 = vector.load %arg3[%c0_1, %c0_2] : memref<1x512xi32, #tpu.memory_space<vmem>>, vector<1x512xi32>
    %c0_3 = arith.constant 0 : index
    %c0_4 = arith.constant 0 : index
    %2 = vector.load %arg4[%c0_3, %c0_4] : memref<1x512xi32, #tpu.memory_space<vmem>>, vector<1x512xi32>
    %c0_5 = arith.constant 0 : index
    %c0_6 = arith.constant 0 : index
    %3 = vector.load %arg0[%c0_5, %c0_6] : memref<64x512xf32, #tpu.memory_space<vmem>>, vector<64x512xf32>
    %c0_i32 = arith.constant 0 : i32
    %4 = vector.broadcast %c0_i32 : i32 to vector<1x512xi32>
    %5 = arith.cmpi eq, %2, %4 : vector<1x512xi32>
    %cst = arith.constant 0.000000e+00 : f32
    %6 = vector.shape_cast %5 : vector<1x512xi1> to vector<1x512xi1>
    %7 = vector.broadcast %6 : vector<1x512xi1> to vector<64x512xi1>
    %8 = vector.broadcast %cst : f32 to vector<64x512xf32>
    %9 = arith.select %7, %3, %8 : vector<64x512xi1>, vector<64x512xf32>
    %c1_i32 = arith.constant 1 : i32
    %10 = vector.broadcast %c1_i32 : i32 to vector<1x512xi32>
    %11 = arith.cmpi eq, %2, %10 : vector<1x512xi32>
    %cst_7 = arith.constant 0.000000e+00 : f32
    %12 = vector.shape_cast %11 : vector<1x512xi1> to vector<1x512xi1>
    %13 = vector.broadcast %12 : vector<1x512xi1> to vector<64x512xi1>
    %14 = vector.broadcast %cst_7 : f32 to vector<64x512xf32>
    %15 = arith.select %13, %3, %14 : vector<64x512xi1>, vector<64x512xf32>
    %c2_i32 = arith.constant 2 : i32
    %16 = vector.broadcast %c2_i32 : i32 to vector<1x512xi32>
    %17 = arith.cmpi eq, %2, %16 : vector<1x512xi32>
    %cst_8 = arith.constant 0.000000e+00 : f32
    %18 = vector.shape_cast %17 : vector<1x512xi1> to vector<1x512xi1>
    %19 = vector.broadcast %18 : vector<1x512xi1> to vector<64x512xi1>
    %20 = vector.broadcast %cst_8 : f32 to vector<64x512xf32>
    %21 = arith.select %19, %3, %20 : vector<64x512xi1>, vector<64x512xf32>
    %c3_i32 = arith.constant 3 : i32
    %22 = vector.broadcast %c3_i32 : i32 to vector<1x512xi32>
    %23 = arith.cmpi eq, %2, %22 : vector<1x512xi32>
    %cst_9 = arith.constant 0.000000e+00 : f32
    %24 = vector.shape_cast %23 : vector<1x512xi1> to vector<1x512xi1>
    %25 = vector.broadcast %24 : vector<1x512xi1> to vector<64x512xi1>
    %26 = vector.broadcast %cst_9 : f32 to vector<64x512xf32>
    %27 = arith.select %25, %3, %26 : vector<64x512xi1>, vector<64x512xf32>
    %c0_10 = arith.constant 0 : index
    %c0_11 = arith.constant 0 : index
    %28 = vector.load %arg5[%c0_10, %c0_11] : memref<32x256xf32, #tpu.memory_space<vmem>>, vector<32x256xf32>
    %29 = tpu.concatenate %9, %15, %21, %27 in 0 : vector<64x512xf32>, vector<64x512xf32>, vector<64x512xf32>, vector<64x512xf32> -> vector<256x512xf32>
    %cst_12 = arith.constant dense<0.000000e+00> : vector<32x512xf32>
    %30 = tpu.matmul %28, %29, %cst_12 {dimension_numbers = #tpu.dot_dimension_numbers<[1], [0], [0], [1], [0, 0, 1, 1], [], []>} : vector<32x256xf32>, vector<256x512xf32>, vector<32x512xf32> -> vector<32x512xf32>
    %c0_13 = arith.constant 0 : index
    %c0_14 = arith.constant 0 : index
    %31 = vector.load %arg6[%c0_13, %c0_14] : memref<32x1xf32, #tpu.memory_space<vmem>>, vector<32x1xf32>
    %32 = vector.broadcast %31 : vector<32x1xf32> to vector<32x512xf32>
    %33 = arith.addf %30, %32 : vector<32x512xf32>
    %c0_15 = arith.constant 0 : index
    %c0_16 = arith.constant 0 : index
    %34 = vector.load %arg1[%c0_15, %c0_16] : memref<32x512xf32, #tpu.memory_space<vmem>>, vector<32x512xf32>
    %35 = tpu.concatenate %34, %33 in 0 : vector<32x512xf32>, vector<32x512xf32> -> vector<64x512xf32>
    %c0_17 = arith.constant 0 : index
    %c0_18 = arith.constant 0 : index
    %36 = vector.load %arg7[%c0_17, %c0_18] : memref<40x64xf32, #tpu.memory_space<vmem>>, vector<40x64xf32>
    %cst_19 = arith.constant dense<0.000000e+00> : vector<40x512xf32>
    %37 = tpu.matmul %36, %35, %cst_19 {dimension_numbers = #tpu.dot_dimension_numbers<[1], [0], [0], [1], [0, 0, 1, 1], [], []>} : vector<40x64xf32>, vector<64x512xf32>, vector<40x512xf32> -> vector<40x512xf32>
    %38 = vector.extract_strided_slice %37 {offsets = [0, 0], sizes = [8, 512], strides = [1, 1]} : vector<40x512xf32> to vector<8x512xf32>
    %cst_20 = arith.constant dense<0.000000e+00> : vector<8xf32>
    %39 = vector.multi_reduction <add>, %38, %cst_20 [1] : vector<8x512xf32> to vector<8xf32>
    %40 = vector.shape_cast %39 : vector<8xf32> to vector<8x1xf32>
    %cst_21 = arith.constant 0.001953125 : f32
    %41 = vector.broadcast %cst_21 : f32 to vector<8x1xf32>
    %42 = arith.mulf %40, %41 : vector<8x1xf32>
    %43 = arith.mulf %38, %38 : vector<8x512xf32>
    %cst_22 = arith.constant dense<0.000000e+00> : vector<8xf32>
    %44 = vector.multi_reduction <add>, %43, %cst_22 [1] : vector<8x512xf32> to vector<8xf32>
    %45 = vector.shape_cast %44 : vector<8xf32> to vector<8x1xf32>
    %cst_23 = arith.constant 0.001953125 : f32
    %46 = vector.broadcast %cst_23 : f32 to vector<8x1xf32>
    %47 = arith.mulf %45, %46 : vector<8x1xf32>
    %48 = arith.mulf %42, %42 : vector<8x1xf32>
    %49 = arith.subf %47, %48 : vector<8x1xf32>
    %c0_24 = arith.constant 0 : index
    %c0_25 = arith.constant 0 : index
    %50 = vector.load %arg9[%c0_24, %c0_25] : memref<8x1xf32, #tpu.memory_space<vmem>>, vector<8x1xf32>
    %cst_26 = arith.constant 9.99999974E-6 : f32
    %51 = vector.broadcast %cst_26 : f32 to vector<8x1xf32>
    %52 = arith.addf %49, %51 : vector<8x1xf32>
    %53 = math.rsqrt %52 : vector<8x1xf32>
    %54 = arith.mulf %50, %53 : vector<8x1xf32>
    %c0_27 = arith.constant 0 : index
    %c0_28 = arith.constant 0 : index
    %55 = vector.load %arg10[%c0_27, %c0_28] : memref<8x1xf32, #tpu.memory_space<vmem>>, vector<8x1xf32>
    %56 = arith.mulf %42, %54 : vector<8x1xf32>
    %57 = arith.subf %55, %56 : vector<8x1xf32>
    %58 = vector.broadcast %54 : vector<8x1xf32> to vector<8x512xf32>
    %59 = arith.mulf %38, %58 : vector<8x512xf32>
    %60 = vector.broadcast %57 : vector<8x1xf32> to vector<8x512xf32>
    %61 = arith.addf %59, %60 : vector<8x512xf32>
    %cst_29 = arith.constant 0.000000e+00 : f32
    %62 = vector.broadcast %cst_29 : f32 to vector<8x512xf32>
    %63 = arith.maximumf %61, %62 : vector<8x512xf32>
    %64 = vector.extract_strided_slice %37 {offsets = [8, 0], sizes = [32, 512], strides = [1, 1]} : vector<40x512xf32> to vector<32x512xf32>
    %c0_30 = arith.constant 0 : index
    %c0_31 = arith.constant 0 : index
    %65 = vector.load %arg8[%c0_30, %c0_31] : memref<32x1xf32, #tpu.memory_space<vmem>>, vector<32x1xf32>
    %66 = vector.broadcast %65 : vector<32x1xf32> to vector<32x512xf32>
    %67 = arith.addf %64, %66 : vector<32x512xf32>
    %c-1_i32 = arith.constant -1 : i32
    %68 = vector.broadcast %c-1_i32 : i32 to vector<1x512xi32>
    %69 = arith.addi %0, %68 : vector<1x512xi32>
    %c0_i32_32 = arith.constant 0 : i32
    %70 = vector.broadcast %c0_i32_32 : i32 to vector<1x512xi32>
    %71 = arith.cmpi sge, %69, %70 : vector<1x512xi32>
    %c-1_i32_33 = arith.constant -1 : i32
    %72 = vector.broadcast %c-1_i32_33 : i32 to vector<1x512xi32>
    %73 = arith.addi %0, %72 : vector<1x512xi32>
    %c16_i32 = arith.constant 16 : i32
    %74 = vector.broadcast %c16_i32 : i32 to vector<1x512xi32>
    %75 = arith.cmpi slt, %73, %74 : vector<1x512xi32>
    %76 = arith.andi %71, %75 : vector<1x512xi1>
    %c-1_i32_34 = arith.constant -1 : i32
    %77 = vector.broadcast %c-1_i32_34 : i32 to vector<1x512xi32>
    %78 = arith.addi %1, %77 : vector<1x512xi32>
    %c0_i32_35 = arith.constant 0 : i32
    %79 = vector.broadcast %c0_i32_35 : i32 to vector<1x512xi32>
    %80 = arith.cmpi sge, %78, %79 : vector<1x512xi32>
    %c-1_i32_36 = arith.constant -1 : i32
    %81 = vector.broadcast %c-1_i32_36 : i32 to vector<1x512xi32>
    %82 = arith.addi %1, %81 : vector<1x512xi32>
    %c16_i32_37 = arith.constant 16 : i32
    %83 = vector.broadcast %c16_i32_37 : i32 to vector<1x512xi32>
    %84 = arith.cmpi slt, %82, %83 : vector<1x512xi32>
    %85 = arith.andi %80, %84 : vector<1x512xi1>
    %86 = arith.andi %76, %85 : vector<1x512xi1>
    %c17_i32 = arith.constant 17 : i32
    %87 = tpu.dynamic_rotate %63 by %c17_i32 dim 1 : vector<8x512xf32>, i32 -> vector<8x512xf32>
    %cst_38 = arith.constant 0.000000e+00 : f32
    %88 = vector.shape_cast %86 : vector<1x512xi1> to vector<1x512xi1>
    %89 = vector.broadcast %88 : vector<1x512xi1> to vector<8x512xi1>
    %90 = vector.broadcast %cst_38 : f32 to vector<8x512xf32>
    %91 = arith.select %89, %87, %90 : vector<8x512xi1>, vector<8x512xf32>
    %c0_i32_39 = arith.constant 0 : i32
    %92 = vector.broadcast %c0_i32_39 : i32 to vector<1x512xi32>
    %93 = arith.addi %1, %92 : vector<1x512xi32>
    %c0_i32_40 = arith.constant 0 : i32
    %94 = vector.broadcast %c0_i32_40 : i32 to vector<1x512xi32>
    %95 = arith.cmpi sge, %93, %94 : vector<1x512xi32>
    %c0_i32_41 = arith.constant 0 : i32
    %96 = vector.broadcast %c0_i32_41 : i32 to vector<1x512xi32>
    %97 = arith.addi %1, %96 : vector<1x512xi32>
    %c16_i32_42 = arith.constant 16 : i32
    %98 = vector.broadcast %c16_i32_42 : i32 to vector<1x512xi32>
    %99 = arith.cmpi slt, %97, %98 : vector<1x512xi32>
    %100 = arith.andi %95, %99 : vector<1x512xi1>
    %101 = arith.andi %76, %100 : vector<1x512xi1>
    %c16_i32_43 = arith.constant 16 : i32
    %102 = tpu.dynamic_rotate %63 by %c16_i32_43 dim 1 : vector<8x512xf32>, i32 -> vector<8x512xf32>
    %cst_44 = arith.constant 0.000000e+00 : f32
    %103 = vector.shape_cast %101 : vector<1x512xi1> to vector<1x512xi1>
    %104 = vector.broadcast %103 : vector<1x512xi1> to vector<8x512xi1>
    %105 = vector.broadcast %cst_44 : f32 to vector<8x512xf32>
    %106 = arith.select %104, %102, %105 : vector<8x512xi1>, vector<8x512xf32>
    %c1_i32_45 = arith.constant 1 : i32
    %107 = vector.broadcast %c1_i32_45 : i32 to vector<1x512xi32>
    %108 = arith.addi %1, %107 : vector<1x512xi32>
    %c0_i32_46 = arith.constant 0 : i32
    %109 = vector.broadcast %c0_i32_46 : i32 to vector<1x512xi32>
    %110 = arith.cmpi sge, %108, %109 : vector<1x512xi32>
    %c1_i32_47 = arith.constant 1 : i32
    %111 = vector.broadcast %c1_i32_47 : i32 to vector<1x512xi32>
    %112 = arith.addi %1, %111 : vector<1x512xi32>
    %c16_i32_48 = arith.constant 16 : i32
    %113 = vector.broadcast %c16_i32_48 : i32 to vector<1x512xi32>
    %114 = arith.cmpi slt, %112, %113 : vector<1x512xi32>
    %115 = arith.andi %110, %114 : vector<1x512xi1>
    %116 = arith.andi %76, %115 : vector<1x512xi1>
    %c15_i32 = arith.constant 15 : i32
    %117 = tpu.dynamic_rotate %63 by %c15_i32 dim 1 : vector<8x512xf32>, i32 -> vector<8x512xf32>
    %cst_49 = arith.constant 0.000000e+00 : f32
    %118 = vector.shape_cast %116 : vector<1x512xi1> to vector<1x512xi1>
    %119 = vector.broadcast %118 : vector<1x512xi1> to vector<8x512xi1>
    %120 = vector.broadcast %cst_49 : f32 to vector<8x512xf32>
    %121 = arith.select %119, %117, %120 : vector<8x512xi1>, vector<8x512xf32>
    %c0_i32_50 = arith.constant 0 : i32
    %122 = vector.broadcast %c0_i32_50 : i32 to vector<1x512xi32>
    %123 = arith.addi %0, %122 : vector<1x512xi32>
    %c0_i32_51 = arith.constant 0 : i32
    %124 = vector.broadcast %c0_i32_51 : i32 to vector<1x512xi32>
    %125 = arith.cmpi sge, %123, %124 : vector<1x512xi32>
    %c0_i32_52 = arith.constant 0 : i32
    %126 = vector.broadcast %c0_i32_52 : i32 to vector<1x512xi32>
    %127 = arith.addi %0, %126 : vector<1x512xi32>
    %c16_i32_53 = arith.constant 16 : i32
    %128 = vector.broadcast %c16_i32_53 : i32 to vector<1x512xi32>
    %129 = arith.cmpi slt, %127, %128 : vector<1x512xi32>
    %130 = arith.andi %125, %129 : vector<1x512xi1>
    %c-1_i32_54 = arith.constant -1 : i32
    %131 = vector.broadcast %c-1_i32_54 : i32 to vector<1x512xi32>
    %132 = arith.addi %1, %131 : vector<1x512xi32>
    %c0_i32_55 = arith.constant 0 : i32
    %133 = vector.broadcast %c0_i32_55 : i32 to vector<1x512xi32>
    %134 = arith.cmpi sge, %132, %133 : vector<1x512xi32>
    %c-1_i32_56 = arith.constant -1 : i32
    %135 = vector.broadcast %c-1_i32_56 : i32 to vector<1x512xi32>
    %136 = arith.addi %1, %135 : vector<1x512xi32>
    %c16_i32_57 = arith.constant 16 : i32
    %137 = vector.broadcast %c16_i32_57 : i32 to vector<1x512xi32>
    %138 = arith.cmpi slt, %136, %137 : vector<1x512xi32>
    %139 = arith.andi %134, %138 : vector<1x512xi1>
    %140 = arith.andi %130, %139 : vector<1x512xi1>
    %c1_i32_58 = arith.constant 1 : i32
    %141 = tpu.dynamic_rotate %63 by %c1_i32_58 dim 1 : vector<8x512xf32>, i32 -> vector<8x512xf32>
    %cst_59 = arith.constant 0.000000e+00 : f32
    %142 = vector.shape_cast %140 : vector<1x512xi1> to vector<1x512xi1>
    %143 = vector.broadcast %142 : vector<1x512xi1> to vector<8x512xi1>
    %144 = vector.broadcast %cst_59 : f32 to vector<8x512xf32>
    %145 = arith.select %143, %141, %144 : vector<8x512xi1>, vector<8x512xf32>
    %c0_i32_60 = arith.constant 0 : i32
    %146 = vector.broadcast %c0_i32_60 : i32 to vector<1x512xi32>
    %147 = arith.addi %1, %146 : vector<1x512xi32>
    %c0_i32_61 = arith.constant 0 : i32
    %148 = vector.broadcast %c0_i32_61 : i32 to vector<1x512xi32>
    %149 = arith.cmpi sge, %147, %148 : vector<1x512xi32>
    %c0_i32_62 = arith.constant 0 : i32
    %150 = vector.broadcast %c0_i32_62 : i32 to vector<1x512xi32>
    %151 = arith.addi %1, %150 : vector<1x512xi32>
    %c16_i32_63 = arith.constant 16 : i32
    %152 = vector.broadcast %c16_i32_63 : i32 to vector<1x512xi32>
    %153 = arith.cmpi slt, %151, %152 : vector<1x512xi32>
    %154 = arith.andi %149, %153 : vector<1x512xi1>
    %155 = arith.andi %130, %154 : vector<1x512xi1>
    %cst_64 = arith.constant 0.000000e+00 : f32
    %156 = vector.shape_cast %155 : vector<1x512xi1> to vector<1x512xi1>
    %157 = vector.broadcast %156 : vector<1x512xi1> to vector<8x512xi1>
    %158 = vector.broadcast %cst_64 : f32 to vector<8x512xf32>
    %159 = arith.select %157, %63, %158 : vector<8x512xi1>, vector<8x512xf32>
    %c1_i32_65 = arith.constant 1 : i32
    %160 = vector.broadcast %c1_i32_65 : i32 to vector<1x512xi32>
    %161 = arith.addi %1, %160 : vector<1x512xi32>
    %c0_i32_66 = arith.constant 0 : i32
    %162 = vector.broadcast %c0_i32_66 : i32 to vector<1x512xi32>
    %163 = arith.cmpi sge, %161, %162 : vector<1x512xi32>
    %c1_i32_67 = arith.constant 1 : i32
    %164 = vector.broadcast %c1_i32_67 : i32 to vector<1x512xi32>
    %165 = arith.addi %1, %164 : vector<1x512xi32>
    %c16_i32_68 = arith.constant 16 : i32
    %166 = vector.broadcast %c16_i32_68 : i32 to vector<1x512xi32>
    %167 = arith.cmpi slt, %165, %166 : vector<1x512xi32>
    %168 = arith.andi %163, %167 : vector<1x512xi1>
    %169 = arith.andi %130, %168 : vector<1x512xi1>
    %c511_i32 = arith.constant 511 : i32
    %170 = tpu.dynamic_rotate %63 by %c511_i32 dim 1 : vector<8x512xf32>, i32 -> vector<8x512xf32>
    %cst_69 = arith.constant 0.000000e+00 : f32
    %171 = vector.shape_cast %169 : vector<1x512xi1> to vector<1x512xi1>
    %172 = vector.broadcast %171 : vector<1x512xi1> to vector<8x512xi1>
    %173 = vector.broadcast %cst_69 : f32 to vector<8x512xf32>
    %174 = arith.select %172, %170, %173 : vector<8x512xi1>, vector<8x512xf32>
    %c1_i32_70 = arith.constant 1 : i32
    %175 = vector.broadcast %c1_i32_70 : i32 to vector<1x512xi32>
    %176 = arith.addi %0, %175 : vector<1x512xi32>
    %c0_i32_71 = arith.constant 0 : i32
    %177 = vector.broadcast %c0_i32_71 : i32 to vector<1x512xi32>
    %178 = arith.cmpi sge, %176, %177 : vector<1x512xi32>
    %c1_i32_72 = arith.constant 1 : i32
    %179 = vector.broadcast %c1_i32_72 : i32 to vector<1x512xi32>
    %180 = arith.addi %0, %179 : vector<1x512xi32>
    %c16_i32_73 = arith.constant 16 : i32
    %181 = vector.broadcast %c16_i32_73 : i32 to vector<1x512xi32>
    %182 = arith.cmpi slt, %180, %181 : vector<1x512xi32>
    %183 = arith.andi %178, %182 : vector<1x512xi1>
    %c-1_i32_74 = arith.constant -1 : i32
    %184 = vector.broadcast %c-1_i32_74 : i32 to vector<1x512xi32>
    %185 = arith.addi %1, %184 : vector<1x512xi32>
    %c0_i32_75 = arith.constant 0 : i32
    %186 = vector.broadcast %c0_i32_75 : i32 to vector<1x512xi32>
    %187 = arith.cmpi sge, %185, %186 : vector<1x512xi32>
    %c-1_i32_76 = arith.constant -1 : i32
    %188 = vector.broadcast %c-1_i32_76 : i32 to vector<1x512xi32>
    %189 = arith.addi %1, %188 : vector<1x512xi32>
    %c16_i32_77 = arith.constant 16 : i32
    %190 = vector.broadcast %c16_i32_77 : i32 to vector<1x512xi32>
    %191 = arith.cmpi slt, %189, %190 : vector<1x512xi32>
    %192 = arith.andi %187, %191 : vector<1x512xi1>
    %193 = arith.andi %183, %192 : vector<1x512xi1>
    %c497_i32 = arith.constant 497 : i32
    %194 = tpu.dynamic_rotate %63 by %c497_i32 dim 1 : vector<8x512xf32>, i32 -> vector<8x512xf32>
    %cst_78 = arith.constant 0.000000e+00 : f32
    %195 = vector.shape_cast %193 : vector<1x512xi1> to vector<1x512xi1>
    %196 = vector.broadcast %195 : vector<1x512xi1> to vector<8x512xi1>
    %197 = vector.broadcast %cst_78 : f32 to vector<8x512xf32>
    %198 = arith.select %196, %194, %197 : vector<8x512xi1>, vector<8x512xf32>
    %c0_i32_79 = arith.constant 0 : i32
    %199 = vector.broadcast %c0_i32_79 : i32 to vector<1x512xi32>
    %200 = arith.addi %1, %199 : vector<1x512xi32>
    %c0_i32_80 = arith.constant 0 : i32
    %201 = vector.broadcast %c0_i32_80 : i32 to vector<1x512xi32>
    %202 = arith.cmpi sge, %200, %201 : vector<1x512xi32>
    %c0_i32_81 = arith.constant 0 : i32
    %203 = vector.broadcast %c0_i32_81 : i32 to vector<1x512xi32>
    %204 = arith.addi %1, %203 : vector<1x512xi32>
    %c16_i32_82 = arith.constant 16 : i32
    %205 = vector.broadcast %c16_i32_82 : i32 to vector<1x512xi32>
    %206 = arith.cmpi slt, %204, %205 : vector<1x512xi32>
    %207 = arith.andi %202, %206 : vector<1x512xi1>
    %208 = arith.andi %183, %207 : vector<1x512xi1>
    %c496_i32 = arith.constant 496 : i32
    %209 = tpu.dynamic_rotate %63 by %c496_i32 dim 1 : vector<8x512xf32>, i32 -> vector<8x512xf32>
    %cst_83 = arith.constant 0.000000e+00 : f32
    %210 = vector.shape_cast %208 : vector<1x512xi1> to vector<1x512xi1>
    %211 = vector.broadcast %210 : vector<1x512xi1> to vector<8x512xi1>
    %212 = vector.broadcast %cst_83 : f32 to vector<8x512xf32>
    %213 = arith.select %211, %209, %212 : vector<8x512xi1>, vector<8x512xf32>
    %c1_i32_84 = arith.constant 1 : i32
    %214 = vector.broadcast %c1_i32_84 : i32 to vector<1x512xi32>
    %215 = arith.addi %1, %214 : vector<1x512xi32>
    %c0_i32_85 = arith.constant 0 : i32
    %216 = vector.broadcast %c0_i32_85 : i32 to vector<1x512xi32>
    %217 = arith.cmpi sge, %215, %216 : vector<1x512xi32>
    %c1_i32_86 = arith.constant 1 : i32
    %218 = vector.broadcast %c1_i32_86 : i32 to vector<1x512xi32>
    %219 = arith.addi %1, %218 : vector<1x512xi32>
    %c16_i32_87 = arith.constant 16 : i32
    %220 = vector.broadcast %c16_i32_87 : i32 to vector<1x512xi32>
    %221 = arith.cmpi slt, %219, %220 : vector<1x512xi32>
    %222 = arith.andi %217, %221 : vector<1x512xi1>
    %223 = arith.andi %183, %222 : vector<1x512xi1>
    %c495_i32 = arith.constant 495 : i32
    %224 = tpu.dynamic_rotate %63 by %c495_i32 dim 1 : vector<8x512xf32>, i32 -> vector<8x512xf32>
    %cst_88 = arith.constant 0.000000e+00 : f32
    %225 = vector.shape_cast %223 : vector<1x512xi1> to vector<1x512xi1>
    %226 = vector.broadcast %225 : vector<1x512xi1> to vector<8x512xi1>
    %227 = vector.broadcast %cst_88 : f32 to vector<8x512xf32>
    %228 = arith.select %226, %224, %227 : vector<8x512xi1>, vector<8x512xf32>
    %c0_89 = arith.constant 0 : index
    %c0_90 = arith.constant 0 : index
    %229 = vector.load %arg11[%c0_89, %c0_90] : memref<8x72xf32, #tpu.memory_space<vmem>>, vector<8x72xf32>
    %230 = tpu.concatenate %91, %106, %121, %145, %159, %174, %198, %213, %228 in 0 : vector<8x512xf32>, vector<8x512xf32>, vector<8x512xf32>, vector<8x512xf32>, vector<8x512xf32>, vector<8x512xf32>, vector<8x512xf32>, vector<8x512xf32>, vector<8x512xf32> -> vector<72x512xf32>
    %cst_91 = arith.constant dense<0.000000e+00> : vector<8x512xf32>
    %231 = tpu.matmul %229, %230, %cst_91 {dimension_numbers = #tpu.dot_dimension_numbers<[1], [0], [0], [1], [0, 0, 1, 1], [], []>} : vector<8x72xf32>, vector<72x512xf32>, vector<8x512xf32> -> vector<8x512xf32>
    %cst_92 = arith.constant dense<0.000000e+00> : vector<8xf32>
    %232 = vector.multi_reduction <add>, %231, %cst_92 [1] : vector<8x512xf32> to vector<8xf32>
    %233 = vector.shape_cast %232 : vector<8xf32> to vector<8x1xf32>
    %cst_93 = arith.constant 0.001953125 : f32
    %234 = vector.broadcast %cst_93 : f32 to vector<8x1xf32>
    %235 = arith.mulf %233, %234 : vector<8x1xf32>
    %236 = arith.mulf %231, %231 : vector<8x512xf32>
    %cst_94 = arith.constant dense<0.000000e+00> : vector<8xf32>
    %237 = vector.multi_reduction <add>, %236, %cst_94 [1] : vector<8x512xf32> to vector<8xf32>
    %238 = vector.shape_cast %237 : vector<8xf32> to vector<8x1xf32>
    %cst_95 = arith.constant 0.001953125 : f32
    %239 = vector.broadcast %cst_95 : f32 to vector<8x1xf32>
    %240 = arith.mulf %238, %239 : vector<8x1xf32>
    %241 = arith.mulf %235, %235 : vector<8x1xf32>
    %242 = arith.subf %240, %241 : vector<8x1xf32>
    %c0_96 = arith.constant 0 : index
    %c0_97 = arith.constant 0 : index
    %243 = vector.load %arg12[%c0_96, %c0_97] : memref<8x1xf32, #tpu.memory_space<vmem>>, vector<8x1xf32>
    %cst_98 = arith.constant 9.99999974E-6 : f32
    %244 = vector.broadcast %cst_98 : f32 to vector<8x1xf32>
    %245 = arith.addf %242, %244 : vector<8x1xf32>
    %246 = math.rsqrt %245 : vector<8x1xf32>
    %247 = arith.mulf %243, %246 : vector<8x1xf32>
    %c0_99 = arith.constant 0 : index
    %c0_100 = arith.constant 0 : index
    %248 = vector.load %arg13[%c0_99, %c0_100] : memref<8x1xf32, #tpu.memory_space<vmem>>, vector<8x1xf32>
    %249 = arith.mulf %235, %247 : vector<8x1xf32>
    %250 = arith.subf %248, %249 : vector<8x1xf32>
    %251 = vector.broadcast %247 : vector<8x1xf32> to vector<8x512xf32>
    %252 = arith.mulf %231, %251 : vector<8x512xf32>
    %253 = vector.broadcast %250 : vector<8x1xf32> to vector<8x512xf32>
    %254 = arith.addf %252, %253 : vector<8x512xf32>
    %cst_101 = arith.constant 0.000000e+00 : f32
    %255 = vector.broadcast %cst_101 : f32 to vector<8x512xf32>
    %256 = arith.maximumf %254, %255 : vector<8x512xf32>
    %c0_102 = arith.constant 0 : index
    %c0_103 = arith.constant 0 : index
    %257 = vector.load %arg14[%c0_102, %c0_103] : memref<32x8xf32, #tpu.memory_space<vmem>>, vector<32x8xf32>
    %cst_104 = arith.constant dense<0.000000e+00> : vector<32x512xf32>
    %258 = tpu.matmul %257, %256, %cst_104 {dimension_numbers = #tpu.dot_dimension_numbers<[1], [0], [0], [1], [0, 0, 1, 1], [], []>} : vector<32x8xf32>, vector<8x512xf32>, vector<32x512xf32> -> vector<32x512xf32>
    %cst_105 = arith.constant dense<0.000000e+00> : vector<32xf32>
    %259 = vector.multi_reduction <add>, %258, %cst_105 [1] : vector<32x512xf32> to vector<32xf32>
    %260 = vector.shape_cast %259 : vector<32xf32> to vector<32x1xf32>
    %cst_106 = arith.constant 0.001953125 : f32
    %261 = vector.broadcast %cst_106 : f32 to vector<32x1xf32>
    %262 = arith.mulf %260, %261 : vector<32x1xf32>
    %263 = arith.mulf %258, %258 : vector<32x512xf32>
    %cst_107 = arith.constant dense<0.000000e+00> : vector<32xf32>
    %264 = vector.multi_reduction <add>, %263, %cst_107 [1] : vector<32x512xf32> to vector<32xf32>
    %265 = vector.shape_cast %264 : vector<32xf32> to vector<32x1xf32>
    %cst_108 = arith.constant 0.001953125 : f32
    %266 = vector.broadcast %cst_108 : f32 to vector<32x1xf32>
    %267 = arith.mulf %265, %266 : vector<32x1xf32>
    %268 = arith.mulf %262, %262 : vector<32x1xf32>
    %269 = arith.subf %267, %268 : vector<32x1xf32>
    %c0_109 = arith.constant 0 : index
    %c0_110 = arith.constant 0 : index
    %270 = vector.load %arg15[%c0_109, %c0_110] : memref<32x1xf32, #tpu.memory_space<vmem>>, vector<32x1xf32>
    %cst_111 = arith.constant 9.99999974E-6 : f32
    %271 = vector.broadcast %cst_111 : f32 to vector<32x1xf32>
    %272 = arith.addf %269, %271 : vector<32x1xf32>
    %273 = math.rsqrt %272 : vector<32x1xf32>
    %274 = arith.mulf %270, %273 : vector<32x1xf32>
    %c0_112 = arith.constant 0 : index
    %c0_113 = arith.constant 0 : index
    %275 = vector.load %arg16[%c0_112, %c0_113] : memref<32x1xf32, #tpu.memory_space<vmem>>, vector<32x1xf32>
    %276 = arith.mulf %262, %274 : vector<32x1xf32>
    %277 = arith.subf %275, %276 : vector<32x1xf32>
    %278 = vector.broadcast %274 : vector<32x1xf32> to vector<32x512xf32>
    %279 = arith.mulf %258, %278 : vector<32x512xf32>
    %280 = vector.broadcast %277 : vector<32x1xf32> to vector<32x512xf32>
    %281 = arith.addf %279, %280 : vector<32x512xf32>
    %282 = arith.addf %67, %281 : vector<32x512xf32>
    %cst_114 = arith.constant 0.000000e+00 : f32
    %283 = vector.broadcast %cst_114 : f32 to vector<32x512xf32>
    %284 = arith.maximumf %282, %283 : vector<32x512xf32>
    %c0_115 = arith.constant 0 : index
    %c0_116 = arith.constant 0 : index
    %285 = vector.load %arg17[%c0_115, %c0_116] : memref<32x512xf32, #tpu.memory_space<vmem>>, vector<32x512xf32>
    tpu.vector_store %arg17[%c0_115, %c0_116], %284 {strides = array<i32>} : memref<32x512xf32, #tpu.memory_space<vmem>>, vector<32x512xf32>,
    return
  }
}

</mosaic_0001>

<llo_original>
// kernel: upsample_block.1
$region0: #{upsample_block.1}
  #allocation0 [shape = 'u32[]', space=smem, size = 0x4, offset = 0x4, fixed_abs, tag = 'smem constant byte address 0x4 - core index']
  #allocation1 [shape = 'u32[72,128]{1,0:T(1,128)}', space=vmem, size = 0x9000, scoped, tag = 'internal scratch']
  %s0 = inlined_call_operand.vmem [shape: f32[64,512], index: 0, kind: input, shape index: {}]
  %s1 = inlined_call_operand.vmem [shape: f32[32,512], index: 1, kind: input, shape index: {}]
  %s2 = inlined_call_operand.vmem [shape: s32[1,512], index: 2, kind: input, shape index: {}]
  %s3 = inlined_call_operand.vmem [shape: s32[1,512], index: 3, kind: input, shape index: {}]
  %s4 = inlined_call_operand.vmem [shape: s32[1,512], index: 4, kind: input, shape index: {}]
  %s5 = inlined_call_operand.vmem [shape: f32[32,256], index: 5, kind: input, shape index: {}]
  %s6 = inlined_call_operand.vmem [shape: f32[32,1], index: 6, kind: input, shape index: {}]
  %s7 = inlined_call_operand.vmem [shape: f32[40,64], index: 7, kind: input, shape index: {}]
  %s8 = inlined_call_operand.vmem [shape: f32[32,1], index: 8, kind: input, shape index: {}]
  %s9 = inlined_call_operand.vmem [shape: f32[8,1], index: 9, kind: input, shape index: {}]
  %s10 = inlined_call_operand.vmem [shape: f32[8,1], index: 10, kind: input, shape index: {}]
  %s11 = inlined_call_operand.vmem [shape: f32[8,72], index: 11, kind: input, shape index: {}]
  %s12 = inlined_call_operand.vmem [shape: f32[8,1], index: 12, kind: input, shape index: {}]
  %s13 = inlined_call_operand.vmem [shape: f32[8,1], index: 13, kind: input, shape index: {}]
  %s14 = inlined_call_operand.vmem [shape: f32[32,8], index: 14, kind: input, shape index: {}]
  %s15 = inlined_call_operand.vmem [shape: f32[32,1], index: 15, kind: input, shape index: {}]
  %s16 = inlined_call_operand.vmem [shape: f32[32,1], index: 16, kind: input, shape index: {}]
  %s17 = inlined_call_operand.vmem [shape: f32[32,512], index: 17, kind: output, shape index: {}]
  %s18 = sld [smem:[#allocation0]]
  $region78: #{upsample_block.1} parent=0
    _
  %s20 = ssub.s32 1, %s18
  %s21 = scalar_select 0, %s20, %s18
  // Predicated region
  $region2: #{upsample_block.1} parent=0 // pred_check
    _
  $region3: #{upsample_block.1} parent=0 // pred_check_branch
    %23 = sbr.rel (0) target = $region5
  $region4: #{upsample_block.1} parent=0 // pred_region
    _
  $region5: #{upsample_block.1} parent=0 // pred_fallthru
    _
  // Predicated region
  $region6: #{upsample_block.1} parent=0 // pred_check
    _
  $region7: #{upsample_block.1} parent=0 // pred_check_branch
    %25 = sbr.rel (0) target = $region9
  $region8: #{upsample_block.1} parent=0 // pred_region
    _
  $region9: #{upsample_block.1} parent=0 // pred_fallthru
    _
  // Predicated region
  $region10: #{upsample_block.1} parent=0 // pred_check
    _
  $region11: #{upsample_block.1} parent=0 // pred_check_branch
    %27 = sbr.rel (0) target = $region13
  $region12: #{upsample_block.1} parent=0 // pred_region
    _
  $region13: #{upsample_block.1} parent=0 // pred_fallthru
    _
  // Predicated region
  $region14: #{upsample_block.1} parent=0 // pred_check
    _
  $region15: #{upsample_block.1} parent=0 // pred_check_branch
    %29 = sbr.rel (0) target = $region17
  $region16: #{upsample_block.1} parent=0 // pred_region
    _
  $region17: #{upsample_block.1} parent=0 // pred_fallthru
    _
  // Predicated region
  $region18: #{upsample_block.1} parent=0 // pred_check
    _
  $region19: #{upsample_block.1} parent=0 // pred_check_branch
    %31 = sbr.rel (0) target = $region21
  $region20: #{upsample_block.1} parent=0 // pred_region
    _
  $region21: #{upsample_block.1} parent=0 // pred_fallthru
    _
  // Predicated region
  $region22: #{upsample_block.1} parent=0 // pred_check
    _
  $region23: #{upsample_block.1} parent=0 // pred_check_branch
    %33 = sbr.rel (0) target = $region25
  $region24: #{upsample_block.1} parent=0 // pred_region
    _
  $region25: #{upsample_block.1} parent=0 // pred_fallthru
    _
  // Predicated region
  $region26: #{upsample_block.1} parent=0 // pred_check
    _
  $region27: #{upsample_block.1} parent=0 // pred_check_branch
    %35 = sbr.rel (0) target = $region29
  $region28: #{upsample_block.1} parent=0 // pred_region
    _
  $region29: #{upsample_block.1} parent=0 // pred_fallthru
    _
  // Predicated region
  $region30: #{upsample_block.1} parent=0 // pred_check
    _
  $region31: #{upsample_block.1} parent=0 // pred_check_branch
    %37 = sbr.rel (0) target = $region33
  $region32: #{upsample_block.1} parent=0 // pred_region
    _
  $region33: #{upsample_block.1} parent=0 // pred_fallthru
    _
  // Predicated region
  $region34: #{upsample_block.1} parent=0 // pred_check
    _
  $region35: #{upsample_block.1} parent=0 // pred_check_branch
    %39 = sbr.rel (0) target = $region37
  $region36: #{upsample_block.1} parent=0 // pred_region
    _
  $region37: #{upsample_block.1} parent=0 // pred_fallthru
    _
  // Predicated region
  $region38: #{upsample_block.1} parent=0 // pred_check
    _
  $region39: #{upsample_block.1} parent=0 // pred_check_branch
    %41 = sbr.rel (0) target = $region41
  $region40: #{upsample_block.1} parent=0 // pred_region
    _
  $region41: #{upsample_block.1} parent=0 // pred_fallthru
    _
  // Predicated region
  $region42: #{upsample_block.1} parent=0 // pred_check
    _
  $region43: #{upsample_block.1} parent=0 // pred_check_branch
    %43 = sbr.rel (0) target = $region45
  $region44: #{upsample_block.1} parent=0 // pred_region
    _
  $region45: #{upsample_block.1} parent=0 // pred_fallthru
    _
  // Predicated region
  $region46: #{upsample_block.1} parent=0 // pred_check
    _
  $region47: #{upsample_block.1} parent=0 // pred_check_branch
    %45 = sbr.rel (0) target = $region49
  $region48: #{upsample_block.1} parent=0 // pred_region
    _
  $region49: #{upsample_block.1} parent=0 // pred_fallthru
    _
  // Predicated region
  $region50: #{upsample_block.1} parent=0 // pred_check
    _
  $region51: #{upsample_block.1} parent=0 // pred_check_branch
    %47 = sbr.rel (0) target = $region53
  $region52: #{upsample_block.1} parent=0 // pred_region
    _
  $region53: #{upsample_block.1} parent=0 // pred_fallthru
    _
  // Predicated region
  $region54: #{upsample_block.1} parent=0 // pred_check
    _
  $region55: #{upsample_block.1} parent=0 // pred_check_branch
    %49 = sbr.rel (0) target = $region57
  $region56: #{upsample_block.1} parent=0 // pred_region
    _
  $region57: #{upsample_block.1} parent=0 // pred_fallthru
    _
  // Predicated region
  $region58: #{upsample_block.1} parent=0 // pred_check
    _
  $region59: #{upsample_block.1} parent=0 // pred_check_branch
    %51 = sbr.rel (0) target = $region61
  $region60: #{upsample_block.1} parent=0 // pred_region
    _
  $region61: #{upsample_block.1} parent=0 // pred_fallthru
    _
  // Predicated region
  $region62: #{upsample_block.1} parent=0 // pred_check
    _
  $region63: #{upsample_block.1} parent=0 // pred_check_branch
    %53 = sbr.rel (0) target = $region65
  $region64: #{upsample_block.1} parent=0 // pred_region
    _
  $region65: #{upsample_block.1} parent=0 // pred_fallthru
    _
  // Predicated region
  $region66: #{upsample_block.1} parent=0 // pred_check
    _
  $region67: #{upsample_block.1} parent=0 // pred_check_branch
    %55 = sbr.rel (0) target = $region69
  $region68: #{upsample_block.1} parent=0 // pred_region
    _
  $region69: #{upsample_block.1} parent=0 // pred_fallthru
    _
  %v56 = vld [vmem:[%s2] sm:$0xf]
  %v57 = vld [vmem:[%s3] sm:$0xf]
  %v58 = vld [vmem:[%s4] sm:$0xf]
  %v59 = vld [vmem:[%s0] sm:$0xff]
  %v60 = vld [vmem:[%s0 + $0x8] sm:$0xff]
  %v61 = vld [vmem:[%s0 + $0x10] sm:$0xff]
  %v62 = vld [vmem:[%s0 + $0x18] sm:$0xff]
  %v63 = vld [vmem:[%s0 + $0x20] sm:$0xff]
  %v64 = vld [vmem:[%s0 + $0x28] sm:$0xff]
  %v65 = vld [vmem:[%s0 + $0x30] sm:$0xff]
  %v66 = vld [vmem:[%s0 + $0x38] sm:$0xff]
  %v67 = vld [vmem:[%s0 + $0x40] sm:$0xff]
  %v68 = vld [vmem:[%s0 + $0x48] sm:$0xff]
  %v69 = vld [vmem:[%s0 + $0x50] sm:$0xff]
  %v70 = vld [vmem:[%s0 + $0x58] sm:$0xff]
  %v71 = vld [vmem:[%s0 + $0x60] sm:$0xff]
  %v72 = vld [vmem:[%s0 + $0x68] sm:$0xff]
  %v73 = vld [vmem:[%s0 + $0x70] sm:$0xff]
  %v74 = vld [vmem:[%s0 + $0x78] sm:$0xff]
  %v75 = vld [vmem:[%s0 + $0x80] sm:$0xff]
  %v76 = vld [vmem:[%s0 + $0x88] sm:$0xff]
  %v77 = vld [vmem:[%s0 + $0x90] sm:$0xff]
  %v78 = vld [vmem:[%s0 + $0x98] sm:$0xff]
  %v79 = vld [vmem:[%s0 + $0xa0] sm:$0xff]
  %v80 = vld [vmem:[%s0 + $0xa8] sm:$0xff]
  %v81 = vld [vmem:[%s0 + $0xb0] sm:$0xff]
  %v82 = vld [vmem:[%s0 + $0xb8] sm:$0xff]
  %v83 = vld [vmem:[%s0 + $0xc0] sm:$0xff]
  %v84 = vld [vmem:[%s0 + $0xc8] sm:$0xff]
  %v85 = vld [vmem:[%s0 + $0xd0] sm:$0xff]
  %v86 = vld [vmem:[%s0 + $0xd8] sm:$0xff]
  %v87 = vld [vmem:[%s0 + $0xe0] sm:$0xff]
  %v88 = vld [vmem:[%s0 + $0xe8] sm:$0xff]
  %v89 = vld [vmem:[%s0 + $0xf0] sm:$0xff]
  %v90 = vld [vmem:[%s0 + $0xf8] sm:$0xff]
  %vm91 = vcmp.eq.s32.totalorder %v58, 0
  %v92 = vsel %vm91, 1, 0
  %v93 = vperm.slane %v92, 0
  %v94 = vperm.slane %v92, 1
  %v95 = vperm.slane %v92, 2
  %v96 = vperm.slane %v92, 3
  %vm97 = vcmp.eq.s32.totalorder %v93, 1
  %vm98 = vcmp.eq.s32.totalorder %v94, 1
  %vm99 = vcmp.eq.s32.totalorder %v95, 1
  %vm100 = vcmp.eq.s32.totalorder %v96, 1
  %v101 = vsel %vm97, %v59, 0.0
  %v102 = vsel %vm98, %v60, 0.0
  %v103 = vsel %vm99, %v61, 0.0
  %v104 = vsel %vm100, %v62, 0.0
  %v105 = vsel %vm97, %v63, 0.0
  %v106 = vsel %vm98, %v64, 0.0
  %v107 = vsel %vm99, %v65, 0.0
  %v108 = vsel %vm100, %v66, 0.0
  %v109 = vsel %vm97, %v67, 0.0
  %v110 = vsel %vm98, %v68, 0.0
  %v111 = vsel %vm99, %v69, 0.0
  %v112 = vsel %vm100, %v70, 0.0
  %v113 = vsel %vm97, %v71, 0.0
  %v114 = vsel %vm98, %v72, 0.0
  %v115 = vsel %vm99, %v73, 0.0
  %v116 = vsel %vm100, %v74, 0.0
  %v117 = vsel %vm97, %v75, 0.0
  %v118 = vsel %vm98, %v76, 0.0
  %v119 = vsel %vm99, %v77, 0.0
  %v120 = vsel %vm100, %v78, 0.0
  %v121 = vsel %vm97, %v79, 0.0
  %v122 = vsel %vm98, %v80, 0.0
  %v123 = vsel %vm99, %v81, 0.0
  %v124 = vsel %vm100, %v82, 0.0
  %v125 = vsel %vm97, %v83, 0.0
  %v126 = vsel %vm98, %v84, 0.0
  %v127 = vsel %vm99, %v85, 0.0
  %v128 = vsel %vm100, %v86, 0.0
  %v129 = vsel %vm97, %v87, 0.0
  %v130 = vsel %vm98, %v88, 0.0
  %v131 = vsel %vm99, %v89, 0.0
  %v132 = vsel %vm100, %v90, 0.0
  %vm133 = vcmp.eq.s32.totalorder %v58, 1
  %v134 = vsel %vm133, 1, 0
  %v135 = vperm.slane %v134, 0
  %v136 = vperm.slane %v134, 1
  %v137 = vperm.slane %v134, 2
  %v138 = vperm.slane %v134, 3
  %vm139 = vcmp.eq.s32.totalorder %v135, 1
  %vm140 = vcmp.eq.s32.totalorder %v136, 1
  %vm141 = vcmp.eq.s32.totalorder %v137, 1
  %vm142 = vcmp.eq.s32.totalorder %v138, 1
  %v143 = vsel %vm139, %v59, 0.0
  %v144 = vsel %vm140, %v60, 0.0
  %v145 = vsel %vm141, %v61, 0.0
  %v146 = vsel %vm142, %v62, 0.0
  %v147 = vsel %vm139, %v63, 0.0
  %v148 = vsel %vm140, %v64, 0.0
  %v149 = vsel %vm141, %v65, 0.0
  %v150 = vsel %vm142, %v66, 0.0
  %v151 = vsel %vm139, %v67, 0.0
  %v152 = vsel %vm140, %v68, 0.0
  %v153 = vsel %vm141, %v69, 0.0
  %v154 = vsel %vm142, %v70, 0.0
  %v155 = vsel %vm139, %v71, 0.0
  %v156 = vsel %vm140, %v72, 0.0
  %v157 = vsel %vm141, %v73, 0.0
  %v158 = vsel %vm142, %v74, 0.0
  %v159 = vsel %vm139, %v75, 0.0
  %v160 = vsel %vm140, %v76, 0.0
  %v161 = vsel %vm141, %v77, 0.0
  %v162 = vsel %vm142, %v78, 0.0
  %v163 = vsel %vm139, %v79, 0.0
  %v164 = vsel %vm140, %v80, 0.0
  %v165 = vsel %vm141, %v81, 0.0
  %v166 = vsel %vm142, %v82, 0.0
  %v167 = vsel %vm139, %v83, 0.0
  %v168 = vsel %vm140, %v84, 0.0
  %v169 = vsel %vm141, %v85, 0.0
  %v170 = vsel %vm142, %v86, 0.0
  %v171 = vsel %vm139, %v87, 0.0
  %v172 = vsel %vm140, %v88, 0.0
  %v173 = vsel %vm141, %v89, 0.0
  %v174 = vsel %vm142, %v90, 0.0
  %vm175 = vcmp.eq.s32.totalorder %v58, 2
  %v176 = vsel %vm175, 1, 0
  %v177 = vperm.slane %v176, 0
  %v178 = vperm.slane %v176, 1
  %v179 = vperm.slane %v176, 2
  %v180 = vperm.slane %v176, 3
  %vm181 = vcmp.eq.s32.totalorder %v177, 1
  %vm182 = vcmp.eq.s32.totalorder %v178, 1
  %vm183 = vcmp.eq.s32.totalorder %v179, 1
  %vm184 = vcmp.eq.s32.totalorder %v180, 1
  %v185 = vsel %vm181, %v59, 0.0
  %v186 = vsel %vm182, %v60, 0.0
  %v187 = vsel %vm183, %v61, 0.0
  %v188 = vsel %vm184, %v62, 0.0
  %v189 = vsel %vm181, %v63, 0.0
  %v190 = vsel %vm182, %v64, 0.0
  %v191 = vsel %vm183, %v65, 0.0
  %v192 = vsel %vm184, %v66, 0.0
  %v193 = vsel %vm181, %v67, 0.0
  %v194 = vsel %vm182, %v68, 0.0
  %v195 = vsel %vm183, %v69, 0.0
  %v196 = vsel %vm184, %v70, 0.0
  %v197 = vsel %vm181, %v71, 0.0
  %v198 = vsel %vm182, %v72, 0.0
  %v199 = vsel %vm183, %v73, 0.0
  %v200 = vsel %vm184, %v74, 0.0
  %v201 = vsel %vm181, %v75, 0.0
  %v202 = vsel %vm182, %v76, 0.0
  %v203 = vsel %vm183, %v77, 0.0
  %v204 = vsel %vm184, %v78, 0.0
  %v205 = vsel %vm181, %v79, 0.0
  %v206 = vsel %vm182, %v80, 0.0
  %v207 = vsel %vm183, %v81, 0.0
  %v208 = vsel %vm184, %v82, 0.0
  %v209 = vsel %vm181, %v83, 0.0
  %v210 = vsel %vm182, %v84, 0.0
  %v211 = vsel %vm183, %v85, 0.0
  %v212 = vsel %vm184, %v86, 0.0
  %v213 = vsel %vm181, %v87, 0.0
  %v214 = vsel %vm182, %v88, 0.0
  %v215 = vsel %vm183, %v89, 0.0
  %v216 = vsel %vm184, %v90, 0.0
  %vm217 = vcmp.eq.s32.totalorder %v58, 3
  %v218 = vsel %vm217, 1, 0
  %v219 = vperm.slane %v218, 0
  %v220 = vperm.slane %v218, 1
  %v221 = vperm.slane %v218, 2
  %v222 = vperm.slane %v218, 3
  %vm223 = vcmp.eq.s32.totalorder %v219, 1
  %vm224 = vcmp.eq.s32.totalorder %v220, 1
  %vm225 = vcmp.eq.s32.totalorder %v221, 1
  %vm226 = vcmp.eq.s32.totalorder %v222, 1
  %v227 = vsel %vm223, %v59, 0.0
  %v228 = vsel %vm224, %v60, 0.0
  %v229 = vsel %vm225, %v61, 0.0
  %v230 = vsel %vm226, %v62, 0.0
  %v231 = vsel %vm223, %v63, 0.0
  %v232 = vsel %vm224, %v64, 0.0
  %v233 = vsel %vm225, %v65, 0.0
  %v234 = vsel %vm226, %v66, 0.0
  %v235 = vsel %vm223, %v67, 0.0
  %v236 = vsel %vm224, %v68, 0.0
  %v237 = vsel %vm225, %v69, 0.0
  %v238 = vsel %vm226, %v70, 0.0
  %v239 = vsel %vm223, %v71, 0.0
  %v240 = vsel %vm224, %v72, 0.0
  %v241 = vsel %vm225, %v73, 0.0
  %v242 = vsel %vm226, %v74, 0.0
  %v243 = vsel %vm223, %v75, 0.0
  %v244 = vsel %vm224, %v76, 0.0
  %v245 = vsel %vm225, %v77, 0.0
  %v246 = vsel %vm226, %v78, 0.0
  %v247 = vsel %vm223, %v79, 0.0
  %v248 = vsel %vm224, %v80, 0.0
  %v249 = vsel %vm225, %v81, 0.0
  %v250 = vsel %vm226, %v82, 0.0
  %v251 = vsel %vm223, %v83, 0.0
  %v252 = vsel %vm224, %v84, 0.0
  %v253 = vsel %vm225, %v85, 0.0
  %v254 = vsel %vm226, %v86, 0.0
  %v255 = vsel %vm223, %v87, 0.0
  %v256 = vsel %vm224, %v88, 0.0
  %v257 = vsel %vm225, %v89, 0.0
  %v258 = vsel %vm226, %v90, 0.0
  %v259 = vld [vmem:[%s5] sm:$0xff]
  %v260 = vld [vmem:[%s5 + $0x8] sm:$0xff]
  %v261 = vld [vmem:[%s5 + $0x10] sm:$0xff]
  %v262 = vld [vmem:[%s5 + $0x18] sm:$0xff]
  %v263 = vld [vmem:[%s5 + $0x20] sm:$0xff]
  %v264 = vld [vmem:[%s5 + $0x28] sm:$0xff]
  %v265 = vld [vmem:[%s5 + $0x30] sm:$0xff]
  %v266 = vld [vmem:[%s5 + $0x38] sm:$0xff]
  %v267 = vld [vmem:[%s6] sm:$0xff]
  %v268 = vld [vmem:[%s6 + $0x8] sm:$0xff]
  %v269 = vld [vmem:[%s6 + $0x10] sm:$0xff]
  %v270 = vld [vmem:[%s6 + $0x18] sm:$0xff]
  %272 = vset.pattern.permute.xlu0 0
  %273 = vperm.xlu0 %272, %v267
  %v274 = vpop.permute.xlu0 %273
  %277 = vset.pattern.permute.xlu0 0
  %278 = vperm.xlu0 %277, %v268
  %v279 = vpop.permute.xlu0 %278
  %282 = vset.pattern.permute.xlu0 0
  %283 = vperm.xlu0 %282, %v269
  %v284 = vpop.permute.xlu0 %283
  %287 = vset.pattern.permute.xlu0 0
  %288 = vperm.xlu0 %287, %v270
  %v289 = vpop.permute.xlu0 %288
  %291 = vmatpush.msra.mxu0 %v171
  %292 = vmatpush.msra.mxu0 %v167
  %293 = vmatpush.msra.mxu0 %v163
  %294 = vmatpush.msra.mxu0 %v159
  %295 = vmatpush.msra.mxu0 %v155
  %296 = vmatpush.msra.mxu0 %v151
  %297 = vmatpush.msra.mxu0 %v147
  %298 = vmatpush.msra.mxu0 %v143
  %299 = vmatpush.msra.mxu0 %v129
  %300 = vmatpush.msra.mxu0 %v125
  %301 = vmatpush.msra.mxu0 %v121
  %302 = vmatpush.msra.mxu0 %v117
  %303 = vmatpush.msra.mxu0 %v113
  %304 = vmatpush.msra.mxu0 %v109
  %305 = vmatpush.msra.mxu0 %v105
  %306 = vmatpush.msra.mxu0 %v101
  %307 = vmatmul.f32.gmra.mxu0 %v259
  %v308 = vpop.f32.mrf.mxu0
  %v309 = vadd.f32 %v274, %v308
  %310 = vmatmul.f32.gmra.mxu0 %v261
  %v311 = vpop.f32.mrf.mxu0
  %v312 = vadd.f32 %v279, %v311
  %313 = vmatmul.f32.gmra.mxu0 %v263
  %v314 = vpop.f32.mrf.mxu0
  %v315 = vadd.f32 %v284, %v314
  %316 = vmatmul.f32.gmra.mxu0 %v265
  %v317 = vpop.f32.mrf.mxu0
  %v318 = vadd.f32 %v289, %v317
  %319 = vdwg.mxu0
  %320 = vmatpush.msra.mxu0 %v255
  %321 = vmatpush.msra.mxu0 %v251
  %322 = vmatpush.msra.mxu0 %v247
  %323 = vmatpush.msra.mxu0 %v243
  %324 = vmatpush.msra.mxu0 %v239
  %325 = vmatpush.msra.mxu0 %v235
  %326 = vmatpush.msra.mxu0 %v231
  %327 = vmatpush.msra.mxu0 %v227
  %328 = vmatpush.msra.mxu0 %v213
  %329 = vmatpush.msra.mxu0 %v209
  %330 = vmatpush.msra.mxu0 %v205
  %331 = vmatpush.msra.mxu0 %v201
  %332 = vmatpush.msra.mxu0 %v197
  %333 = vmatpush.msra.mxu0 %v193
  %334 = vmatpush.msra.mxu0 %v189
  %335 = vmatpush.msra.mxu0 %v185
  %336 = vmatmul.f32.gmra.mxu0 %v260
  %v337 = vpop.f32.mrf.mxu0
  %v338 = vadd.f32 %v309, %v337
  %339 = vmatmul.f32.gmra.mxu0 %v262
  %v340 = vpop.f32.mrf.mxu0
  %v341 = vadd.f32 %v312, %v340
  %342 = vmatmul.f32.gmra.mxu0 %v264
  %v343 = vpop.f32.mrf.mxu0
  %v344 = vadd.f32 %v315, %v343
  %345 = vmatmul.f32.gmra.mxu0 %v266
  %v346 = vpop.f32.mrf.mxu0
  %v347 = vadd.f32 %v318, %v346
  %348 = vdwg.mxu0
  %349 = vmatpush.msra.mxu0 %v172
  %350 = vmatpush.msra.mxu0 %v168
  %351 = vmatpush.msra.mxu0 %v164
  %352 = vmatpush.msra.mxu0 %v160
  %353 = vmatpush.msra.mxu0 %v156
  %354 = vmatpush.msra.mxu0 %v152
  %355 = vmatpush.msra.mxu0 %v148
  %356 = vmatpush.msra.mxu0 %v144
  %357 = vmatpush.msra.mxu0 %v130
  %358 = vmatpush.msra.mxu0 %v126
  %359 = vmatpush.msra.mxu0 %v122
  %360 = vmatpush.msra.mxu0 %v118
  %361 = vmatpush.msra.mxu0 %v114
  %362 = vmatpush.msra.mxu0 %v110
  %363 = vmatpush.msra.mxu0 %v106
  %364 = vmatpush.msra.mxu0 %v102
  %365 = vmatmul.f32.gmra.mxu0 %v259
  %v366 = vpop.f32.mrf.mxu0
  %v367 = vadd.f32 %v274, %v366
  %368 = vmatmul.f32.gmra.mxu0 %v261
  %v369 = vpop.f32.mrf.mxu0
  %v370 = vadd.f32 %v279, %v369
  %371 = vmatmul.f32.gmra.mxu0 %v263
  %v372 = vpop.f32.mrf.mxu0
  %v373 = vadd.f32 %v284, %v372
  %374 = vmatmul.f32.gmra.mxu0 %v265
  %v375 = vpop.f32.mrf.mxu0
  %v376 = vadd.f32 %v289, %v375
  %377 = vdwg.mxu0
  %378 = vmatpush.msra.mxu0 %v256
  %379 = vmatpush.msra.mxu0 %v252
  %380 = vmatpush.msra.mxu0 %v248
  %381 = vmatpush.msra.mxu0 %v244
  %382 = vmatpush.msra.mxu0 %v240
  %383 = vmatpush.msra.mxu0 %v236
  %384 = vmatpush.msra.mxu0 %v232
  %385 = vmatpush.msra.mxu0 %v228
  %386 = vmatpush.msra.mxu0 %v214
  %387 = vmatpush.msra.mxu0 %v210
  %388 = vmatpush.msra.mxu0 %v206
  %389 = vmatpush.msra.mxu0 %v202
  %390 = vmatpush.msra.mxu0 %v198
  %391 = vmatpush.msra.mxu0 %v194
  %392 = vmatpush.msra.mxu0 %v190
  %393 = vmatpush.msra.mxu0 %v186
  %394 = vmatmul.f32.gmra.mxu0 %v260
  %v395 = vpop.f32.mrf.mxu0
  %v396 = vadd.f32 %v367, %v395
  %397 = vmatmul.f32.gmra.mxu0 %v262
  %v398 = vpop.f32.mrf.mxu0
  %v399 = vadd.f32 %v370, %v398
  %400 = vmatmul.f32.gmra.mxu0 %v264
  %v401 = vpop.f32.mrf.mxu0
  %v402 = vadd.f32 %v373, %v401
  %403 = vmatmul.f32.gmra.mxu0 %v266
  %v404 = vpop.f32.mrf.mxu0
  %v405 = vadd.f32 %v376, %v404
  %406 = vdwg.mxu0
  %407 = vmatpush.msra.mxu0 %v173
  %408 = vmatpush.msra.mxu0 %v169
  %409 = vmatpush.msra.mxu0 %v165
  %410 = vmatpush.msra.mxu0 %v161
  %411 = vmatpush.msra.mxu0 %v157
  %412 = vmatpush.msra.mxu0 %v153
  %413 = vmatpush.msra.mxu0 %v149
  %414 = vmatpush.msra.mxu0 %v145
  %415 = vmatpush.msra.mxu0 %v131
  %416 = vmatpush.msra.mxu0 %v127
  %417 = vmatpush.msra.mxu0 %v123
  %418 = vmatpush.msra.mxu0 %v119
  %419 = vmatpush.msra.mxu0 %v115
  %420 = vmatpush.msra.mxu0 %v111
  %421 = vmatpush.msra.mxu0 %v107
  %422 = vmatpush.msra.mxu0 %v103
  %423 = vmatmul.f32.gmra.mxu0 %v259
  %v424 = vpop.f32.mrf.mxu0
  %v425 = vadd.f32 %v274, %v424
  %426 = vmatmul.f32.gmra.mxu0 %v261
  %v427 = vpop.f32.mrf.mxu0
  %v428 = vadd.f32 %v279, %v427
  %429 = vmatmul.f32.gmra.mxu0 %v263
  %v430 = vpop.f32.mrf.mxu0
  %v431 = vadd.f32 %v284, %v430
  %432 = vmatmul.f32.gmra.mxu0 %v265
  %v433 = vpop.f32.mrf.mxu0
  %v434 = vadd.f32 %v289, %v433
  %435 = vdwg.mxu0
  %436 = vmatpush.msra.mxu0 %v257
  %437 = vmatpush.msra.mxu0 %v253
  %438 = vmatpush.msra.mxu0 %v249
  %439 = vmatpush.msra.mxu0 %v245
  %440 = vmatpush.msra.mxu0 %v241
  %441 = vmatpush.msra.mxu0 %v237
  %442 = vmatpush.msra.mxu0 %v233
  %443 = vmatpush.msra.mxu0 %v229
  %444 = vmatpush.msra.mxu0 %v215
  %445 = vmatpush.msra.mxu0 %v211
  %446 = vmatpush.msra.mxu0 %v207
  %447 = vmatpush.msra.mxu0 %v203
  %448 = vmatpush.msra.mxu0 %v199
  %449 = vmatpush.msra.mxu0 %v195
  %450 = vmatpush.msra.mxu0 %v191
  %451 = vmatpush.msra.mxu0 %v187
  %452 = vmatmul.f32.gmra.mxu0 %v260
  %v453 = vpop.f32.mrf.mxu0
  %v454 = vadd.f32 %v425, %v453
  %455 = vmatmul.f32.gmra.mxu0 %v262
  %v456 = vpop.f32.mrf.mxu0
  %v457 = vadd.f32 %v428, %v456
  %458 = vmatmul.f32.gmra.mxu0 %v264
  %v459 = vpop.f32.mrf.mxu0
  %v460 = vadd.f32 %v431, %v459
  %461 = vmatmul.f32.gmra.mxu0 %v266
  %v462 = vpop.f32.mrf.mxu0
  %v463 = vadd.f32 %v434, %v462
  %464 = vdwg.mxu0
  %465 = vmatpush.msra.mxu0 %v174
  %466 = vmatpush.msra.mxu0 %v170
  %467 = vmatpush.msra.mxu0 %v166
  %468 = vmatpush.msra.mxu0 %v162
  %469 = vmatpush.msra.mxu0 %v158
  %470 = vmatpush.msra.mxu0 %v154
  %471 = vmatpush.msra.mxu0 %v150
  %472 = vmatpush.msra.mxu0 %v146
  %473 = vmatpush.msra.mxu0 %v132
  %474 = vmatpush.msra.mxu0 %v128
  %475 = vmatpush.msra.mxu0 %v124
  %476 = vmatpush.msra.mxu0 %v120
  %477 = vmatpush.msra.mxu0 %v116
  %478 = vmatpush.msra.mxu0 %v112
  %479 = vmatpush.msra.mxu0 %v108
  %480 = vmatpush.msra.mxu0 %v104
  %481 = vmatmul.f32.gmra.mxu0 %v259
  %v482 = vpop.f32.mrf.mxu0
  %v483 = vadd.f32 %v274, %v482
  %484 = vmatmul.f32.gmra.mxu0 %v261
  %v485 = vpop.f32.mrf.mxu0
  %v486 = vadd.f32 %v279, %v485
  %487 = vmatmul.f32.gmra.mxu0 %v263
  %v488 = vpop.f32.mrf.mxu0
  %v489 = vadd.f32 %v284, %v488
  %490 = vmatmul.f32.gmra.mxu0 %v265
  %v491 = vpop.f32.mrf.mxu0
  %v492 = vadd.f32 %v289, %v491
  %493 = vdwg.mxu0
  %494 = vmatpush.msra.mxu0 %v258
  %495 = vmatpush.msra.mxu0 %v254
  %496 = vmatpush.msra.mxu0 %v250
  %497 = vmatpush.msra.mxu0 %v246
  %498 = vmatpush.msra.mxu0 %v242
  %499 = vmatpush.msra.mxu0 %v238
  %500 = vmatpush.msra.mxu0 %v234
  %501 = vmatpush.msra.mxu0 %v230
  %502 = vmatpush.msra.mxu0 %v216
  %503 = vmatpush.msra.mxu0 %v212
  %504 = vmatpush.msra.mxu0 %v208
  %505 = vmatpush.msra.mxu0 %v204
  %506 = vmatpush.msra.mxu0 %v200
  %507 = vmatpush.msra.mxu0 %v196
  %508 = vmatpush.msra.mxu0 %v192
  %509 = vmatpush.msra.mxu0 %v188
  %510 = vmatmul.f32.gmra.mxu0 %v260
  %v511 = vpop.f32.mrf.mxu0
  %v512 = vadd.f32 %v483, %v511
  %513 = vmatmul.f32.gmra.mxu0 %v262
  %v514 = vpop.f32.mrf.mxu0
  %v515 = vadd.f32 %v486, %v514
  %516 = vmatmul.f32.gmra.mxu0 %v264
  %v517 = vpop.f32.mrf.mxu0
  %v518 = vadd.f32 %v489, %v517
  %519 = vmatmul.f32.gmra.mxu0 %v266
  %v520 = vpop.f32.mrf.mxu0
  %v521 = vadd.f32 %v492, %v520
  %522 = vdwg.mxu0
  %v523 = vld [vmem:[%s1] sm:$0xff]
  %v524 = vld [vmem:[%s1 + $0x8] sm:$0xff]
  %v525 = vld [vmem:[%s1 + $0x10] sm:$0xff]
  %v526 = vld [vmem:[%s1 + $0x18] sm:$0xff]
  %v527 = vld [vmem:[%s1 + $0x20] sm:$0xff]
  %v528 = vld [vmem:[%s1 + $0x28] sm:$0xff]
  %v529 = vld [vmem:[%s1 + $0x30] sm:$0xff]
  %v530 = vld [vmem:[%s1 + $0x38] sm:$0xff]
  %v531 = vld [vmem:[%s1 + $0x40] sm:$0xff]
  %v532 = vld [vmem:[%s1 + $0x48] sm:$0xff]
  %v533 = vld [vmem:[%s1 + $0x50] sm:$0xff]
  %v534 = vld [vmem:[%s1 + $0x58] sm:$0xff]
  %v535 = vld [vmem:[%s1 + $0x60] sm:$0xff]
  %v536 = vld [vmem:[%s1 + $0x68] sm:$0xff]
  %v537 = vld [vmem:[%s1 + $0x70] sm:$0xff]
  %v538 = vld [vmem:[%s1 + $0x78] sm:$0xff]
  %v539 = vld [vmem:[%s7] sm:$0xff]
  %v540 = vld [vmem:[%s7 + $0x8] sm:$0xff]
  %v541 = vld [vmem:[%s7 + $0x10] sm:$0xff]
  %v542 = vld [vmem:[%s7 + $0x18] sm:$0xff]
  %v543 = vld [vmem:[%s7 + $0x20] sm:$0xff]
  %vm544 = vcmask 523264
  %v546 = vsel %vm544, %v539, 0
  %v549 = vsel %vm544, %v540, 0
  %v552 = vsel %vm544, %v541, 0
  %v555 = vsel %vm544, %v542, 0
  %v558 = vsel %vm544, %v543, 0
  %560 = vmatpush.msra.mxu0 0.0
  %561 = vmatpush.msra.mxu0 0.0
  %562 = vmatpush.msra.mxu0 0.0
  %563 = vmatpush.msra.mxu0 0.0
  %564 = vmatpush.msra.mxu0 0.0
  %565 = vmatpush.msra.mxu0 0.0
  %566 = vmatpush.msra.mxu0 0.0
  %567 = vmatpush.msra.mxu0 0.0
  %568 = vmatpush.msra.mxu0 %v347
  %569 = vmatpush.msra.mxu0 %v344
  %570 = vmatpush.msra.mxu0 %v341
  %571 = vmatpush.msra.mxu0 %v338
  %572 = vmatpush.msra.mxu0 %v535
  %573 = vmatpush.msra.mxu0 %v531
  %574 = vmatpush.msra.mxu0 %v527
  %575 = vmatpush.msra.mxu0 %v523
  %576 = vmatmul.f32.gmra.mxu0 %v546
  %v577 = vpop.f32.mrf.mxu0
  %v578 = vadd.f32 0.0, %v577
  %579 = vmatmul.f32.gmra.mxu0 %v549
  %v580 = vpop.f32.mrf.mxu0
  %v581 = vadd.f32 0.0, %v580
  %582 = vmatmul.f32.gmra.mxu0 %v552
  %v583 = vpop.f32.mrf.mxu0
  %v584 = vadd.f32 0.0, %v583
  %585 = vmatmul.f32.gmra.mxu0 %v555
  %v586 = vpop.f32.mrf.mxu0
  %v587 = vadd.f32 0.0, %v586
  %588 = vmatmul.f32.gmra.mxu0 %v558
  %v589 = vpop.f32.mrf.mxu0
  %v590 = vadd.f32 0.0, %v589
  %591 = vdwg.mxu0
  %592 = vmatpush.msra.mxu0 0.0
  %593 = vmatpush.msra.mxu0 0.0
  %594 = vmatpush.msra.mxu0 0.0
  %595 = vmatpush.msra.mxu0 0.0
  %596 = vmatpush.msra.mxu0 0.0
  %597 = vmatpush.msra.mxu0 0.0
  %598 = vmatpush.msra.mxu0 0.0
  %599 = vmatpush.msra.mxu0 0.0
  %600 = vmatpush.msra.mxu0 %v405
  %601 = vmatpush.msra.mxu0 %v402
  %602 = vmatpush.msra.mxu0 %v399
  %603 = vmatpush.msra.mxu0 %v396
  %604 = vmatpush.msra.mxu0 %v536
  %605 = vmatpush.msra.mxu0 %v532
  %606 = vmatpush.msra.mxu0 %v528
  %607 = vmatpush.msra.mxu0 %v524
  %608 = vmatmul.f32.gmra.mxu0 %v546
  %v609 = vpop.f32.mrf.mxu0
  %v610 = vadd.f32 0.0, %v609
  %611 = vmatmul.f32.gmra.mxu0 %v549
  %v612 = vpop.f32.mrf.mxu0
  %v613 = vadd.f32 0.0, %v612
  %614 = vmatmul.f32.gmra.mxu0 %v552
  %v615 = vpop.f32.mrf.mxu0
  %v616 = vadd.f32 0.0, %v615
  %617 = vmatmul.f32.gmra.mxu0 %v555
  %v618 = vpop.f32.mrf.mxu0
  %v619 = vadd.f32 0.0, %v618
  %620 = vmatmul.f32.gmra.mxu0 %v558
  %v621 = vpop.f32.mrf.mxu0
  %v622 = vadd.f32 0.0, %v621
  %623 = vdwg.mxu0
  %624 = vmatpush.msra.mxu0 0.0
  %625 = vmatpush.msra.mxu0 0.0
  %626 = vmatpush.msra.mxu0 0.0
  %627 = vmatpush.msra.mxu0 0.0
  %628 = vmatpush.msra.mxu0 0.0
  %629 = vmatpush.msra.mxu0 0.0
  %630 = vmatpush.msra.mxu0 0.0
  %631 = vmatpush.msra.mxu0 0.0
  %632 = vmatpush.msra.mxu0 %v463
  %633 = vmatpush.msra.mxu0 %v460
  %634 = vmatpush.msra.mxu0 %v457
  %635 = vmatpush.msra.mxu0 %v454
  %636 = vmatpush.msra.mxu0 %v537
  %637 = vmatpush.msra.mxu0 %v533
  %638 = vmatpush.msra.mxu0 %v529
  %639 = vmatpush.msra.mxu0 %v525
  %640 = vmatmul.f32.gmra.mxu0 %v546
  %v641 = vpop.f32.mrf.mxu0
  %v642 = vadd.f32 0.0, %v641
  %643 = vmatmul.f32.gmra.mxu0 %v549
  %v644 = vpop.f32.mrf.mxu0
  %v645 = vadd.f32 0.0, %v644
  %646 = vmatmul.f32.gmra.mxu0 %v552
  %v647 = vpop.f32.mrf.mxu0
  %v648 = vadd.f32 0.0, %v647
  %649 = vmatmul.f32.gmra.mxu0 %v555
  %v650 = vpop.f32.mrf.mxu0
  %v651 = vadd.f32 0.0, %v650
  %652 = vmatmul.f32.gmra.mxu0 %v558
  %v653 = vpop.f32.mrf.mxu0
  %v654 = vadd.f32 0.0, %v653
  %655 = vdwg.mxu0
  %656 = vmatpush.msra.mxu0 0.0
  %657 = vmatpush.msra.mxu0 0.0
  %658 = vmatpush.msra.mxu0 0.0
  %659 = vmatpush.msra.mxu0 0.0
  %660 = vmatpush.msra.mxu0 0.0
  %661 = vmatpush.msra.mxu0 0.0
  %662 = vmatpush.msra.mxu0 0.0
  %663 = vmatpush.msra.mxu0 0.0
  %664 = vmatpush.msra.mxu0 %v521
  %665 = vmatpush.msra.mxu0 %v518
  %666 = vmatpush.msra.mxu0 %v515
  %667 = vmatpush.msra.mxu0 %v512
  %668 = vmatpush.msra.mxu0 %v538
  %669 = vmatpush.msra.mxu0 %v534
  %670 = vmatpush.msra.mxu0 %v530
  %671 = vmatpush.msra.mxu0 %v526
  %672 = vmatmul.f32.gmra.mxu0 %v546
  %v673 = vpop.f32.mrf.mxu0
  %v674 = vadd.f32 0.0, %v673
  %675 = vmatmul.f32.gmra.mxu0 %v549
  %v676 = vpop.f32.mrf.mxu0
  %v677 = vadd.f32 0.0, %v676
  %678 = vmatmul.f32.gmra.mxu0 %v552
  %v679 = vpop.f32.mrf.mxu0
  %v680 = vadd.f32 0.0, %v679
  %681 = vmatmul.f32.gmra.mxu0 %v555
  %v682 = vpop.f32.mrf.mxu0
  %v683 = vadd.f32 0.0, %v682
  %684 = vmatmul.f32.gmra.mxu0 %v558
  %v685 = vpop.f32.mrf.mxu0
  %v686 = vadd.f32 0.0, %v685
  %687 = vdwg.mxu0
  %v688 = vadd.f32 %v578, %v610
  %v689 = vadd.f32 %v688, %v642
  %v690 = vadd.f32 %v689, %v674
  %691 = vadd.xlane.f32.xlu0 %v690
  %v692 = vpop.xlane.xlu0 %691
  %v693 = vmul.f32 %v692, 0.001953125
  %v694 = vmul.f32 %v578, %v578
  %v695 = vmul.f32 %v610, %v610
  %v696 = vmul.f32 %v642, %v642
  %v697 = vmul.f32 %v674, %v674
  %v698 = vadd.f32 %v694, %v695
  %v699 = vadd.f32 %v698, %v696
  %v700 = vadd.f32 %v699, %v697
  %701 = vadd.xlane.f32.xlu0 %v700
  %v702 = vpop.xlane.xlu0 %701
  %v703 = vmul.f32 %v702, 0.001953125
  %v704 = vmul.f32 %v693, %v693
  %v705 = vsub.f32 %v703, %v704
  %v706 = vld [vmem:[%s9] sm:$0xff]
  %v707 = vadd.f32 %v705, 1e-05
  %v708 = vrsqrt.pop %v707
  %v709 = vmul.f32 %v708, %v707
  %v710 = vmul.f32 %v709, %v708
  %v711 = vmul.f32 0.5, %v710
  %v712 = vsub.f32 1.5, %v711
  %v713 = vmul.f32 %v708, %v712
  %vm714 = vweird.f32 %v707
  %vm715 = vweird.f32 %v708
  %vm716 = vmor %vm714, %vm715
  %v717 = vsel %vm716, %v708, %v713
  %v718 = vmul.f32 %v706, %v717
  %v719 = vld [vmem:[%s10] sm:$0xff]
  %v720 = vmul.f32 %v693, %v718
  %v721 = vsub.f32 %v719, %v720
  %723 = vset.pattern.permute.xlu0 0
  %724 = vperm.xlu0 %723, %v718
  %v725 = vpop.permute.xlu0 %724
  %v727 = vmul.f32 %v578, %v725
  %v728 = vmul.f32 %v610, %v725
  %v729 = vmul.f32 %v642, %v725
  %v730 = vmul.f32 %v674, %v725
  %732 = vset.pattern.permute.xlu0 0
  %733 = vperm.xlu0 %732, %v721
  %v734 = vpop.permute.xlu0 %733
  %v736 = vadd.f32 %v727, %v734
  %v737 = vadd.f32 %v728, %v734
  %v738 = vadd.f32 %v729, %v734
  %v739 = vadd.f32 %v730, %v734
  %v740 = vmax.f32 %v736, 0.0
  %v741 = vmax.f32 %v737, 0.0
  %v742 = vmax.f32 %v738, 0.0
  %v743 = vmax.f32 %v739, 0.0
  %v744 = vld [vmem:[%s8] sm:$0xff]
  %v745 = vld [vmem:[%s8 + $0x8] sm:$0xff]
  %v746 = vld [vmem:[%s8 + $0x10] sm:$0xff]
  %v747 = vld [vmem:[%s8 + $0x18] sm:$0xff]
  %749 = vset.pattern.permute.xlu0 0
  %750 = vperm.xlu0 %749, %v744
  %v751 = vpop.permute.xlu0 %750
  %754 = vset.pattern.permute.xlu0 0
  %755 = vperm.xlu0 %754, %v745
  %v756 = vpop.permute.xlu0 %755
  %759 = vset.pattern.permute.xlu0 0
  %760 = vperm.xlu0 %759, %v746
  %v761 = vpop.permute.xlu0 %760
  %764 = vset.pattern.permute.xlu0 0
  %765 = vperm.xlu0 %764, %v747
  %v766 = vpop.permute.xlu0 %765
  %v768 = vadd.f32 %v581, %v751
  %v769 = vadd.f32 %v613, %v751
  %v770 = vadd.f32 %v645, %v751
  %v771 = vadd.f32 %v677, %v751
  %v772 = vadd.f32 %v584, %v756
  %v773 = vadd.f32 %v616, %v756
  %v774 = vadd.f32 %v648, %v756
  %v775 = vadd.f32 %v680, %v756
  %v776 = vadd.f32 %v587, %v761
  %v777 = vadd.f32 %v619, %v761
  %v778 = vadd.f32 %v651, %v761
  %v779 = vadd.f32 %v683, %v761
  %v780 = vadd.f32 %v590, %v766
  %v781 = vadd.f32 %v622, %v766
  %v782 = vadd.f32 %v654, %v766
  %v783 = vadd.f32 %v686, %v766
  %v784 = vadd.s32 %v56, 4294967295
  %vm785 = vcmp.ge.s32.totalorder %v784, 0
  %vm786 = vcmp.lt.s32.totalorder %v784, 16
  %vm787 = vmand %vm785, %vm786
  %v788 = vadd.s32 %v57, 4294967295
  %vm789 = vcmp.ge.s32.totalorder %v788, 0
  %vm790 = vcmp.lt.s32.totalorder %v788, 16
  %vm791 = vmand %vm789, %vm790
  %vm792 = vmand %vm787, %vm791
  %793 = vrot.lane.b32.xlu0 %v740, 17
  %v794 = vpop.permute.xlu0 %793
  %795 = vrot.lane.b32.xlu0 %v741, 17
  %v796 = vpop.permute.xlu0 %795
  %797 = vrot.lane.b32.xlu0 %v742, 17
  %v798 = vpop.permute.xlu0 %797
  %799 = vrot.lane.b32.xlu0 %v743, 17
  %v800 = vpop.permute.xlu0 %799
  %v801 = vlaneseq
  %v802 = vand.u32 %v801, 127
  %vm803 = vcmp.lt.s32.totalorder %v802, 17
  %v804 = vsel %vm803, %v798, %v800
  %v805 = vsel %vm803, %v796, %v798
  %v806 = vsel %vm803, %v794, %v796
  %v807 = vsel %vm803, %v800, %v794
  %v808 = vsel %vm792, 1, 0
  %v809 = vperm.slane %v808, 0
  %v810 = vperm.slane %v808, 1
  %v811 = vperm.slane %v808, 2
  %v812 = vperm.slane %v808, 3
  %vm813 = vcmp.eq.s32.totalorder %v809, 1
  %vm814 = vcmp.eq.s32.totalorder %v810, 1
  %vm815 = vcmp.eq.s32.totalorder %v811, 1
  %vm816 = vcmp.eq.s32.totalorder %v812, 1
  %v817 = vsel %vm813, %v807, 0.0
  %v818 = vsel %vm814, %v806, 0.0
  %v819 = vsel %vm815, %v805, 0.0
  %v820 = vsel %vm816, %v804, 0.0
  %vm821 = vcmp.ge.s32.totalorder %v57, 0
  %vm822 = vcmp.lt.s32.totalorder %v57, 16
  %vm823 = vmand %vm821, %vm822
  %vm824 = vmand %vm787, %vm823
  %825 = vrot.lane.b32.xlu0 %v740, 16
  %v826 = vpop.permute.xlu0 %825
  %827 = vrot.lane.b32.xlu0 %v741, 16
  %v828 = vpop.permute.xlu0 %827
  %829 = vrot.lane.b32.xlu0 %v742, 16
  %v830 = vpop.permute.xlu0 %829
  %831 = vrot.lane.b32.xlu0 %v743, 16
  %v832 = vpop.permute.xlu0 %831
  %vm833 = vcmp.lt.s32.totalorder %v802, 16
  %v834 = vsel %vm833, %v830, %v832
  %v835 = vsel %vm833, %v828, %v830
  %v836 = vsel %vm833, %v826, %v828
  %v837 = vsel %vm833, %v832, %v826
  %v838 = vsel %vm824, 1, 0
  %v839 = vperm.slane %v838, 0
  %v840 = vperm.slane %v838, 1
  %v841 = vperm.slane %v838, 2
  %v842 = vperm.slane %v838, 3
  %vm843 = vcmp.eq.s32.totalorder %v839, 1
  %vm844 = vcmp.eq.s32.totalorder %v840, 1
  %vm845 = vcmp.eq.s32.totalorder %v841, 1
  %vm846 = vcmp.eq.s32.totalorder %v842, 1
  %v847 = vsel %vm843, %v837, 0.0
  %v848 = vsel %vm844, %v836, 0.0
  %v849 = vsel %vm845, %v835, 0.0
  %v850 = vsel %vm846, %v834, 0.0
  %v851 = vadd.s32 %v57, 1
  %vm852 = vcmp.ge.s32.totalorder %v851, 0
  %vm853 = vcmp.lt.s32.totalorder %v851, 16
  %vm854 = vmand %vm852, %vm853
  %vm855 = vmand %vm787, %vm854
  %856 = vrot.lane.b32.xlu0 %v740, 15
  %v857 = vpop.permute.xlu0 %856
  %858 = vrot.lane.b32.xlu0 %v741, 15
  %v859 = vpop.permute.xlu0 %858
  %860 = vrot.lane.b32.xlu0 %v742, 15
  %v861 = vpop.permute.xlu0 %860
  %862 = vrot.lane.b32.xlu0 %v743, 15
  %v863 = vpop.permute.xlu0 %862
  %vm864 = vcmp.lt.s32.totalorder %v802, 15
  %v865 = vsel %vm864, %v861, %v863
  %v866 = vsel %vm864, %v859, %v861
  %v867 = vsel %vm864, %v857, %v859
  %v868 = vsel %vm864, %v863, %v857
  %v869 = vsel %vm855, 1, 0
  %v870 = vperm.slane %v869, 0
  %v871 = vperm.slane %v869, 1
  %v872 = vperm.slane %v869, 2
  %v873 = vperm.slane %v869, 3
  %vm874 = vcmp.eq.s32.totalorder %v870, 1
  %vm875 = vcmp.eq.s32.totalorder %v871, 1
  %vm876 = vcmp.eq.s32.totalorder %v872, 1
  %vm877 = vcmp.eq.s32.totalorder %v873, 1
  %v878 = vsel %vm874, %v868, 0.0
  %v879 = vsel %vm875, %v867, 0.0
  %v880 = vsel %vm876, %v866, 0.0
  %v881 = vsel %vm877, %v865, 0.0
  %vm882 = vcmp.ge.s32.totalorder %v56, 0
  %vm883 = vcmp.lt.s32.totalorder %v56, 16
  %vm884 = vmand %vm882, %vm883
  %vm885 = vmand %vm884, %vm791
  %886 = vrot.lane.b32.xlu0 %v740, 1
  %v887 = vpop.permute.xlu0 %886
  %888 = vrot.lane.b32.xlu0 %v741, 1
  %v889 = vpop.permute.xlu0 %888
  %890 = vrot.lane.b32.xlu0 %v742, 1
  %v891 = vpop.permute.xlu0 %890
  %892 = vrot.lane.b32.xlu0 %v743, 1
  %v893 = vpop.permute.xlu0 %892
  %vm894 = vcmp.lt.s32.totalorder %v802, 1
  %v895 = vsel %vm894, %v891, %v893
  %v896 = vsel %vm894, %v889, %v891
  %v897 = vsel %vm894, %v887, %v889
  %v898 = vsel %vm894, %v893, %v887
  %v899 = vsel %vm885, 1, 0
  %v900 = vperm.slane %v899, 0
  %v901 = vperm.slane %v899, 1
  %v902 = vperm.slane %v899, 2
  %v903 = vperm.slane %v899, 3
  %vm904 = vcmp.eq.s32.totalorder %v900, 1
  %vm905 = vcmp.eq.s32.totalorder %v901, 1
  %vm906 = vcmp.eq.s32.totalorder %v902, 1
  %vm907 = vcmp.eq.s32.totalorder %v903, 1
  %v908 = vsel %vm904, %v898, 0.0
  %v909 = vsel %vm905, %v897, 0.0
  %v910 = vsel %vm906, %v896, 0.0
  %v911 = vsel %vm907, %v895, 0.0
  %vm912 = vmand %vm884, %vm823
  %v913 = vsel %vm912, 1, 0
  %v914 = vperm.slane %v913, 0
  %v915 = vperm.slane %v913, 1
  %v916 = vperm.slane %v913, 2
  %v917 = vperm.slane %v913, 3
  %vm918 = vcmp.eq.s32.totalorder %v914, 1
  %vm919 = vcmp.eq.s32.totalorder %v915, 1
  %vm920 = vcmp.eq.s32.totalorder %v916, 1
  %vm921 = vcmp.eq.s32.totalorder %v917, 1
  %v922 = vsel %vm918, %v740, 0.0
  %v923 = vsel %vm919, %v741, 0.0
  %v924 = vsel %vm920, %v742, 0.0
  %v925 = vsel %vm921, %v743, 0.0
  %vm926 = vmand %vm884, %vm854
  %927 = vrot.lane.b32.xlu0 %v740, 127
  %v928 = vpop.permute.xlu0 %927
  %929 = vrot.lane.b32.xlu0 %v741, 127
  %v930 = vpop.permute.xlu0 %929
  %931 = vrot.lane.b32.xlu0 %v742, 127
  %v932 = vpop.permute.xlu0 %931
  %933 = vrot.lane.b32.xlu0 %v743, 127
  %v934 = vpop.permute.xlu0 %933
  %vm935 = vcmp.lt.s32.totalorder %v802, 127
  %v936 = vsel %vm935, %v932, %v934
  %v937 = vsel %vm935, %v930, %v932
  %v938 = vsel %vm935, %v928, %v930
  %v939 = vsel %vm935, %v934, %v928
  %v940 = vsel %vm926, 1, 0
  %v941 = vperm.slane %v940, 0
  %v942 = vperm.slane %v940, 1
  %v943 = vperm.slane %v940, 2
  %v944 = vperm.slane %v940, 3
  %vm945 = vcmp.eq.s32.totalorder %v941, 1
  %vm946 = vcmp.eq.s32.totalorder %v942, 1
  %vm947 = vcmp.eq.s32.totalorder %v943, 1
  %vm948 = vcmp.eq.s32.totalorder %v944, 1
  %v949 = vsel %vm945, %v938, 0.0
  %v950 = vsel %vm946, %v937, 0.0
  %v951 = vsel %vm947, %v936, 0.0
  %v952 = vsel %vm948, %v939, 0.0
  %v953 = vadd.s32 %v56, 1
  %vm954 = vcmp.ge.s32.totalorder %v953, 0
  %vm955 = vcmp.lt.s32.totalorder %v953, 16
  %vm956 = vmand %vm954, %vm955
  %vm957 = vmand %vm956, %vm791
  %958 = vrot.lane.b32.xlu0 %v740, 113
  %v959 = vpop.permute.xlu0 %958
  %960 = vrot.lane.b32.xlu0 %v741, 113
  %v961 = vpop.permute.xlu0 %960
  %962 = vrot.lane.b32.xlu0 %v742, 113
  %v963 = vpop.permute.xlu0 %962
  %964 = vrot.lane.b32.xlu0 %v743, 113
  %v965 = vpop.permute.xlu0 %964
  %vm966 = vcmp.lt.s32.totalorder %v802, 113
  %v967 = vsel %vm966, %v963, %v965
  %v968 = vsel %vm966, %v961, %v963
  %v969 = vsel %vm966, %v959, %v961
  %v970 = vsel %vm966, %v965, %v959
  %v971 = vsel %vm957, 1, 0
  %v972 = vperm.slane %v971, 0
  %v973 = vperm.slane %v971, 1
  %v974 = vperm.slane %v971, 2
  %v975 = vperm.slane %v971, 3
  %vm976 = vcmp.eq.s32.totalorder %v972, 1
  %vm977 = vcmp.eq.s32.totalorder %v973, 1
  %vm978 = vcmp.eq.s32.totalorder %v974, 1
  %vm979 = vcmp.eq.s32.totalorder %v975, 1
  %v980 = vsel %vm976, %v969, 0.0
  %v981 = vsel %vm977, %v968, 0.0
  %v982 = vsel %vm978, %v967, 0.0
  %v983 = vsel %vm979, %v970, 0.0
  %vm984 = vmand %vm956, %vm823
  %985 = vrot.lane.b32.xlu0 %v740, 112
  %v986 = vpop.permute.xlu0 %985
  %987 = vrot.lane.b32.xlu0 %v741, 112
  %v988 = vpop.permute.xlu0 %987
  %989 = vrot.lane.b32.xlu0 %v742, 112
  %v990 = vpop.permute.xlu0 %989
  %991 = vrot.lane.b32.xlu0 %v743, 112
  %v992 = vpop.permute.xlu0 %991
  %vm993 = vcmp.lt.s32.totalorder %v802, 112
  %v994 = vsel %vm993, %v990, %v992
  %v995 = vsel %vm993, %v988, %v990
  %v996 = vsel %vm993, %v986, %v988
  %v997 = vsel %vm993, %v992, %v986
  %v998 = vsel %vm984, 1, 0
  %v999 = vperm.slane %v998, 0
  %v1000 = vperm.slane %v998, 1
  %v1001 = vperm.slane %v998, 2
  %v1002 = vperm.slane %v998, 3
  %vm1003 = vcmp.eq.s32.totalorder %v999, 1
  %vm1004 = vcmp.eq.s32.totalorder %v1000, 1
  %vm1005 = vcmp.eq.s32.totalorder %v1001, 1
  %vm1006 = vcmp.eq.s32.totalorder %v1002, 1
  %v1007 = vsel %vm1003, %v996, 0.0
  %v1008 = vsel %vm1004, %v995, 0.0
  %v1009 = vsel %vm1005, %v994, 0.0
  %v1010 = vsel %vm1006, %v997, 0.0
  %vm1011 = vmand %vm956, %vm854
  %1012 = vrot.lane.b32.xlu0 %v740, 111
  %v1013 = vpop.permute.xlu0 %1012
  %1014 = vrot.lane.b32.xlu0 %v741, 111
  %v1015 = vpop.permute.xlu0 %1014
  %1016 = vrot.lane.b32.xlu0 %v742, 111
  %v1017 = vpop.permute.xlu0 %1016
  %1018 = vrot.lane.b32.xlu0 %v743, 111
  %v1019 = vpop.permute.xlu0 %1018
  %vm1020 = vcmp.lt.s32.totalorder %v802, 111
  %v1021 = vsel %vm1020, %v1017, %v1019
  %v1022 = vsel %vm1020, %v1015, %v1017
  %v1023 = vsel %vm1020, %v1013, %v1015
  %v1024 = vsel %vm1020, %v1019, %v1013
  %v1025 = vsel %vm1011, 1, 0
  %v1026 = vperm.slane %v1025, 0
  %v1027 = vperm.slane %v1025, 1
  %v1028 = vperm.slane %v1025, 2
  %v1029 = vperm.slane %v1025, 3
  %vm1030 = vcmp.eq.s32.totalorder %v1026, 1
  %vm1031 = vcmp.eq.s32.totalorder %v1027, 1
  %vm1032 = vcmp.eq.s32.totalorder %v1028, 1
  %vm1033 = vcmp.eq.s32.totalorder %v1029, 1
  %v1034 = vsel %vm1030, %v1023, 0.0
  %v1035 = vsel %vm1031, %v1022, 0.0
  %v1036 = vsel %vm1032, %v1021, 0.0
  %v1037 = vsel %vm1033, %v1024, 0.0
  %v1038 = vld [vmem:[%s11] sm:$0xff]
  %vm1039 = vcmask 588800
  %v1041 = vsel %vm1039, %v1038, 0
  %1043 = vmatpush.msra.mxu0 0.0
  %1044 = vmatpush.msra.mxu0 0.0
  %1045 = vmatpush.msra.mxu0 0.0
  %1046 = vmatpush.msra.mxu0 0.0
  %1047 = vmatpush.msra.mxu0 0.0
  %1048 = vmatpush.msra.mxu0 0.0
  %1049 = vmatpush.msra.mxu0 0.0
  %1050 = vmatpush.msra.mxu0 %v1034
  %1051 = vmatpush.msra.mxu0 %v1007
  %1052 = vmatpush.msra.mxu0 %v980
  %1053 = vmatpush.msra.mxu0 %v949
  %1054 = vmatpush.msra.mxu0 %v922
  %1055 = vmatpush.msra.mxu0 %v908
  %1056 = vmatpush.msra.mxu0 %v878
  %1057 = vmatpush.msra.mxu0 %v847
  %1058 = vmatpush.msra.mxu0 %v817
  %1059 = vmatmul.f32.gmra.mxu0 %v1041
  %v1060 = vpop.f32.mrf.mxu0
  %v1061 = vadd.f32 0.0, %v1060
  %1062 = vdwg.mxu0
  %1063 = vmatpush.msra.mxu0 0.0
  %1064 = vmatpush.msra.mxu0 0.0
  %1065 = vmatpush.msra.mxu0 0.0
  %1066 = vmatpush.msra.mxu0 0.0
  %1067 = vmatpush.msra.mxu0 0.0
  %1068 = vmatpush.msra.mxu0 0.0
  %1069 = vmatpush.msra.mxu0 0.0
  %1070 = vmatpush.msra.mxu0 %v1035
  %1071 = vmatpush.msra.mxu0 %v1008
  %1072 = vmatpush.msra.mxu0 %v981
  %1073 = vmatpush.msra.mxu0 %v950
  %1074 = vmatpush.msra.mxu0 %v923
  %1075 = vmatpush.msra.mxu0 %v909
  %1076 = vmatpush.msra.mxu0 %v879
  %1077 = vmatpush.msra.mxu0 %v848
  %1078 = vmatpush.msra.mxu0 %v818
  %1079 = vmatmul.f32.gmra.mxu0 %v1041
  %v1080 = vpop.f32.mrf.mxu0
  %v1081 = vadd.f32 0.0, %v1080
  %1082 = vdwg.mxu0
  %1083 = vmatpush.msra.mxu0 0.0
  %1084 = vmatpush.msra.mxu0 0.0
  %1085 = vmatpush.msra.mxu0 0.0
  %1086 = vmatpush.msra.mxu0 0.0
  %1087 = vmatpush.msra.mxu0 0.0
  %1088 = vmatpush.msra.mxu0 0.0
  %1089 = vmatpush.msra.mxu0 0.0
  %1090 = vmatpush.msra.mxu0 %v1036
  %1091 = vmatpush.msra.mxu0 %v1009
  %1092 = vmatpush.msra.mxu0 %v982
  %1093 = vmatpush.msra.mxu0 %v951
  %1094 = vmatpush.msra.mxu0 %v924
  %1095 = vmatpush.msra.mxu0 %v910
  %1096 = vmatpush.msra.mxu0 %v880
  %1097 = vmatpush.msra.mxu0 %v849
  %1098 = vmatpush.msra.mxu0 %v819
  %1099 = vmatmul.f32.gmra.mxu0 %v1041
  %v1100 = vpop.f32.mrf.mxu0
  %v1101 = vadd.f32 0.0, %v1100
  %1102 = vdwg.mxu0
  %1103 = vmatpush.msra.mxu0 0.0
  %1104 = vmatpush.msra.mxu0 0.0
  %1105 = vmatpush.msra.mxu0 0.0
  %1106 = vmatpush.msra.mxu0 0.0
  %1107 = vmatpush.msra.mxu0 0.0
  %1108 = vmatpush.msra.mxu0 0.0
  %1109 = vmatpush.msra.mxu0 0.0
  %1110 = vmatpush.msra.mxu0 %v1037
  %1111 = vmatpush.msra.mxu0 %v1010
  %1112 = vmatpush.msra.mxu0 %v983
  %1113 = vmatpush.msra.mxu0 %v952
  %1114 = vmatpush.msra.mxu0 %v925
  %1115 = vmatpush.msra.mxu0 %v911
  %1116 = vmatpush.msra.mxu0 %v881
  %1117 = vmatpush.msra.mxu0 %v850
  %1118 = vmatpush.msra.mxu0 %v820
  %1119 = vmatmul.f32.gmra.mxu0 %v1041
  %v1120 = vpop.f32.mrf.mxu0
  %v1121 = vadd.f32 0.0, %v1120
  %1122 = vdwg.mxu0
  %v1123 = vadd.f32 %v1061, %v1081
  %v1124 = vadd.f32 %v1123, %v1101
  %v1125 = vadd.f32 %v1124, %v1121
  %1126 = vadd.xlane.f32.xlu0 %v1125
  %v1127 = vpop.xlane.xlu0 %1126
  %v1128 = vmul.f32 %v1127, 0.001953125
  %v1129 = vmul.f32 %v1061, %v1061
  %v1130 = vmul.f32 %v1081, %v1081
  %v1131 = vmul.f32 %v1101, %v1101
  %v1132 = vmul.f32 %v1121, %v1121
  %v1133 = vadd.f32 %v1129, %v1130
  %v1134 = vadd.f32 %v1133, %v1131
  %v1135 = vadd.f32 %v1134, %v1132
  %1136 = vadd.xlane.f32.xlu0 %v1135
  %v1137 = vpop.xlane.xlu0 %1136
  %v1138 = vmul.f32 %v1137, 0.001953125
  %v1139 = vmul.f32 %v1128, %v1128
  %v1140 = vsub.f32 %v1138, %v1139
  %v1141 = vld [vmem:[%s12] sm:$0xff]
  %v1142 = vadd.f32 %v1140, 1e-05
  %v1143 = vrsqrt.pop %v1142
  %v1144 = vmul.f32 %v1143, %v1142
  %v1145 = vmul.f32 %v1144, %v1143
  %v1146 = vmul.f32 0.5, %v1145
  %v1147 = vsub.f32 1.5, %v1146
  %v1148 = vmul.f32 %v1143, %v1147
  %vm1149 = vweird.f32 %v1142
  %vm1150 = vweird.f32 %v1143
  %vm1151 = vmor %vm1149, %vm1150
  %v1152 = vsel %vm1151, %v1143, %v1148
  %v1153 = vmul.f32 %v1141, %v1152
  %v1154 = vld [vmem:[%s13] sm:$0xff]
  %v1155 = vmul.f32 %v1128, %v1153
  %v1156 = vsub.f32 %v1154, %v1155
  %1158 = vset.pattern.permute.xlu0 0
  %1159 = vperm.xlu0 %1158, %v1153
  %v1160 = vpop.permute.xlu0 %1159
  %v1162 = vmul.f32 %v1061, %v1160
  %v1163 = vmul.f32 %v1081, %v1160
  %v1164 = vmul.f32 %v1101, %v1160
  %v1165 = vmul.f32 %v1121, %v1160
  %1167 = vset.pattern.permute.xlu0 0
  %1168 = vperm.xlu0 %1167, %v1156
  %v1169 = vpop.permute.xlu0 %1168
  %v1171 = vadd.f32 %v1162, %v1169
  %v1172 = vadd.f32 %v1163, %v1169
  %v1173 = vadd.f32 %v1164, %v1169
  %v1174 = vadd.f32 %v1165, %v1169
  %v1175 = vmax.f32 %v1171, 0.0
  %v1176 = vmax.f32 %v1172, 0.0
  %v1177 = vmax.f32 %v1173, 0.0
  %v1178 = vmax.f32 %v1174, 0.0
  %v1179 = vld [vmem:[%s14] sm:$0xff]
  %v1180 = vld [vmem:[%s14 + $0x8] sm:$0xff]
  %v1181 = vld [vmem:[%s14 + $0x10] sm:$0xff]
  %v1182 = vld [vmem:[%s14 + $0x18] sm:$0xff]
  %vm1183 = vcmask 64512
  %v1185 = vsel %vm1183, %v1179, 0
  %v1188 = vsel %vm1183, %v1180, 0
  %v1191 = vsel %vm1183, %v1181, 0
  %v1194 = vsel %vm1183, %v1182, 0
  %1196 = vmatpush.msra.mxu0 0.0
  %1197 = vmatpush.msra.mxu0 0.0
  %1198 = vmatpush.msra.mxu0 0.0
  %1199 = vmatpush.msra.mxu0 0.0
  %1200 = vmatpush.msra.mxu0 0.0
  %1201 = vmatpush.msra.mxu0 0.0
  %1202 = vmatpush.msra.mxu0 0.0
  %1203 = vmatpush.msra.mxu0 0.0
  %1204 = vmatpush.msra.mxu0 0.0
  %1205 = vmatpush.msra.mxu0 0.0
  %1206 = vmatpush.msra.mxu0 0.0
  %1207 = vmatpush.msra.mxu0 0.0
  %1208 = vmatpush.msra.mxu0 0.0
  %1209 = vmatpush.msra.mxu0 0.0
  %1210 = vmatpush.msra.mxu0 0.0
  %1211 = vmatpush.msra.mxu0 %v1175
  %1212 = vmatmul.f32.gmra.mxu0 %v1185
  %v1213 = vpop.f32.mrf.mxu0
  %v1214 = vadd.f32 0.0, %v1213
  %1215 = vmatmul.f32.gmra.mxu0 %v1188
  %v1216 = vpop.f32.mrf.mxu0
  %v1217 = vadd.f32 0.0, %v1216
  %1218 = vmatmul.f32.gmra.mxu0 %v1191
  %v1219 = vpop.f32.mrf.mxu0
  %v1220 = vadd.f32 0.0, %v1219
  %1221 = vmatmul.f32.gmra.mxu0 %v1194
  %v1222 = vpop.f32.mrf.mxu0
  %v1223 = vadd.f32 0.0, %v1222
  %1224 = vdwg.mxu0
  %1225 = vmatpush.msra.mxu0 0.0
  %1226 = vmatpush.msra.mxu0 0.0
  %1227 = vmatpush.msra.mxu0 0.0
  %1228 = vmatpush.msra.mxu0 0.0
  %1229 = vmatpush.msra.mxu0 0.0
  %1230 = vmatpush.msra.mxu0 0.0
  %1231 = vmatpush.msra.mxu0 0.0
  %1232 = vmatpush.msra.mxu0 0.0
  %1233 = vmatpush.msra.mxu0 0.0
  %1234 = vmatpush.msra.mxu0 0.0
  %1235 = vmatpush.msra.mxu0 0.0
  %1236 = vmatpush.msra.mxu0 0.0
  %1237 = vmatpush.msra.mxu0 0.0
  %1238 = vmatpush.msra.mxu0 0.0
  %1239 = vmatpush.msra.mxu0 0.0
  %1240 = vmatpush.msra.mxu0 %v1176
  %1241 = vmatmul.f32.gmra.mxu0 %v1185
  %v1242 = vpop.f32.mrf.mxu0
  %v1243 = vadd.f32 0.0, %v1242
  %1244 = vmatmul.f32.gmra.mxu0 %v1188
  %v1245 = vpop.f32.mrf.mxu0
  %v1246 = vadd.f32 0.0, %v1245
  %1247 = vmatmul.f32.gmra.mxu0 %v1191
  %v1248 = vpop.f32.mrf.mxu0
  %v1249 = vadd.f32 0.0, %v1248
  %1250 = vmatmul.f32.gmra.mxu0 %v1194
  %v1251 = vpop.f32.mrf.mxu0
  %v1252 = vadd.f32 0.0, %v1251
  %1253 = vdwg.mxu0
  %1254 = vmatpush.msra.mxu0 0.0
  %1255 = vmatpush.msra.mxu0 0.0
  %1256 = vmatpush.msra.mxu0 0.0
  %1257 = vmatpush.msra.mxu0 0.0
  %1258 = vmatpush.msra.mxu0 0.0
  %1259 = vmatpush.msra.mxu0 0.0
  %1260 = vmatpush.msra.mxu0 0.0
  %1261 = vmatpush.msra.mxu0 0.0
  %1262 = vmatpush.msra.mxu0 0.0
  %1263 = vmatpush.msra.mxu0 0.0
  %1264 = vmatpush.msra.mxu0 0.0
  %1265 = vmatpush.msra.mxu0 0.0
  %1266 = vmatpush.msra.mxu0 0.0
  %1267 = vmatpush.msra.mxu0 0.0
  %1268 = vmatpush.msra.mxu0 0.0
  %1269 = vmatpush.msra.mxu0 %v1177
  %1270 = vmatmul.f32.gmra.mxu0 %v1185
  %v1271 = vpop.f32.mrf.mxu0
  %v1272 = vadd.f32 0.0, %v1271
  %1273 = vmatmul.f32.gmra.mxu0 %v1188
  %v1274 = vpop.f32.mrf.mxu0
  %v1275 = vadd.f32 0.0, %v1274
  %1276 = vmatmul.f32.gmra.mxu0 %v1191
  %v1277 = vpop.f32.mrf.mxu0
  %v1278 = vadd.f32 0.0, %v1277
  %1279 = vmatmul.f32.gmra.mxu0 %v1194
  %v1280 = vpop.f32.mrf.mxu0
  %v1281 = vadd.f32 0.0, %v1280
  %1282 = vdwg.mxu0
  %1283 = vmatpush.msra.mxu0 0.0
  %1284 = vmatpush.msra.mxu0 0.0
  %1285 = vmatpush.msra.mxu0 0.0
  %1286 = vmatpush.msra.mxu0 0.0
  %1287 = vmatpush.msra.mxu0 0.0
  %1288 = vmatpush.msra.mxu0 0.0
  %1289 = vmatpush.msra.mxu0 0.0
  %1290 = vmatpush.msra.mxu0 0.0
  %1291 = vmatpush.msra.mxu0 0.0
  %1292 = vmatpush.msra.mxu0 0.0
  %1293 = vmatpush.msra.mxu0 0.0
  %1294 = vmatpush.msra.mxu0 0.0
  %1295 = vmatpush.msra.mxu0 0.0
  %1296 = vmatpush.msra.mxu0 0.0
  %1297 = vmatpush.msra.mxu0 0.0
  %1298 = vmatpush.msra.mxu0 %v1178
  %1299 = vmatmul.f32.gmra.mxu0 %v1185
  %v1300 = vpop.f32.mrf.mxu0
  %v1301 = vadd.f32 0.0, %v1300
  %1302 = vmatmul.f32.gmra.mxu0 %v1188
  %v1303 = vpop.f32.mrf.mxu0
  %v1304 = vadd.f32 0.0, %v1303
  %1305 = vmatmul.f32.gmra.mxu0 %v1191
  %v1306 = vpop.f32.mrf.mxu0
  %v1307 = vadd.f32 0.0, %v1306
  %1308 = vmatmul.f32.gmra.mxu0 %v1194
  %v1309 = vpop.f32.mrf.mxu0
  %v1310 = vadd.f32 0.0, %v1309
  %1311 = vdwg.mxu0
  %v1312 = vadd.f32 %v1214, %v1243
  %v1313 = vadd.f32 %v1312, %v1272
  %v1314 = vadd.f32 %v1313, %v1301
  %1315 = vadd.xlane.f32.xlu0 %v1314
  %v1316 = vpop.xlane.xlu0 %1315
  %v1317 = vadd.f32 %v1217, %v1246
  %v1318 = vadd.f32 %v1317, %v1275
  %v1319 = vadd.f32 %v1318, %v1304
  %1320 = vadd.xlane.f32.xlu0 %v1319
  %v1321 = vpop.xlane.xlu0 %1320
  %v1322 = vadd.f32 %v1220, %v1249
  %v1323 = vadd.f32 %v1322, %v1278
  %v1324 = vadd.f32 %v1323, %v1307
  %1325 = vadd.xlane.f32.xlu0 %v1324
  %v1326 = vpop.xlane.xlu0 %1325
  %v1327 = vadd.f32 %v1223, %v1252
  %v1328 = vadd.f32 %v1327, %v1281
  %v1329 = vadd.f32 %v1328, %v1310
  %1330 = vadd.xlane.f32.xlu0 %v1329
  %v1331 = vpop.xlane.xlu0 %1330
  %v1332 = vmul.f32 %v1316, 0.001953125
  %v1333 = vmul.f32 %v1321, 0.001953125
  %v1334 = vmul.f32 %v1326, 0.001953125
  %v1335 = vmul.f32 %v1331, 0.001953125
  %v1336 = vmul.f32 %v1214, %v1214
  %v1337 = vmul.f32 %v1243, %v1243
  %v1338 = vmul.f32 %v1272, %v1272
  %v1339 = vmul.f32 %v1301, %v1301
  %v1340 = vmul.f32 %v1217, %v1217
  %v1341 = vmul.f32 %v1246, %v1246
  %v1342 = vmul.f32 %v1275, %v1275
  %v1343 = vmul.f32 %v1304, %v1304
  %v1344 = vmul.f32 %v1220, %v1220
  %v1345 = vmul.f32 %v1249, %v1249
  %v1346 = vmul.f32 %v1278, %v1278
  %v1347 = vmul.f32 %v1307, %v1307
  %v1348 = vmul.f32 %v1223, %v1223
  %v1349 = vmul.f32 %v1252, %v1252
  %v1350 = vmul.f32 %v1281, %v1281
  %v1351 = vmul.f32 %v1310, %v1310
  %v1352 = vadd.f32 %v1336, %v1337
  %v1353 = vadd.f32 %v1352, %v1338
  %v1354 = vadd.f32 %v1353, %v1339
  %1355 = vadd.xlane.f32.xlu0 %v1354
  %v1356 = vpop.xlane.xlu0 %1355
  %v1357 = vadd.f32 %v1340, %v1341
  %v1358 = vadd.f32 %v1357, %v1342
  %v1359 = vadd.f32 %v1358, %v1343
  %1360 = vadd.xlane.f32.xlu0 %v1359
  %v1361 = vpop.xlane.xlu0 %1360
  %v1362 = vadd.f32 %v1344, %v1345
  %v1363 = vadd.f32 %v1362, %v1346
  %v1364 = vadd.f32 %v1363, %v1347
  %1365 = vadd.xlane.f32.xlu0 %v1364
  %v1366 = vpop.xlane.xlu0 %1365
  %v1367 = vadd.f32 %v1348, %v1349
  %v1368 = vadd.f32 %v1367, %v1350
  %v1369 = vadd.f32 %v1368, %v1351
  %1370 = vadd.xlane.f32.xlu0 %v1369
  %v1371 = vpop.xlane.xlu0 %1370
  %v1372 = vmul.f32 %v1356, 0.001953125
  %v1373 = vmul.f32 %v1361, 0.001953125
  %v1374 = vmul.f32 %v1366, 0.001953125
  %v1375 = vmul.f32 %v1371, 0.001953125
  %v1376 = vmul.f32 %v1332, %v1332
  %v1377 = vmul.f32 %v1333, %v1333
  %v1378 = vmul.f32 %v1334, %v1334
  %v1379 = vmul.f32 %v1335, %v1335
  %v1380 = vsub.f32 %v1372, %v1376
  %v1381 = vsub.f32 %v1373, %v1377
  %v1382 = vsub.f32 %v1374, %v1378
  %v1383 = vsub.f32 %v1375, %v1379
  %v1384 = vld [vmem:[%s15] sm:$0xff]
  %v1385 = vld [vmem:[%s15 + $0x8] sm:$0xff]
  %v1386 = vld [vmem:[%s15 + $0x10] sm:$0xff]
  %v1387 = vld [vmem:[%s15 + $0x18] sm:$0xff]
  %v1388 = vadd.f32 %v1380, 1e-05
  %v1389 = vadd.f32 %v1381, 1e-05
  %v1390 = vadd.f32 %v1382, 1e-05
  %v1391 = vadd.f32 %v1383, 1e-05
  %v1392 = vrsqrt.pop %v1388
  %v1393 = vmul.f32 %v1392, %v1388
  %v1394 = vmul.f32 %v1393, %v1392
  %v1395 = vmul.f32 0.5, %v1394
  %v1396 = vsub.f32 1.5, %v1395
  %v1397 = vmul.f32 %v1392, %v1396
  %vm1398 = vweird.f32 %v1388
  %vm1399 = vweird.f32 %v1392
  %vm1400 = vmor %vm1398, %vm1399
  %v1401 = vsel %vm1400, %v1392, %v1397
  %v1402 = vrsqrt.pop %v1389
  %v1403 = vmul.f32 %v1402, %v1389
  %v1404 = vmul.f32 %v1403, %v1402
  %v1405 = vmul.f32 0.5, %v1404
  %v1406 = vsub.f32 1.5, %v1405
  %v1407 = vmul.f32 %v1402, %v1406
  %vm1408 = vweird.f32 %v1389
  %vm1409 = vweird.f32 %v1402
  %vm1410 = vmor %vm1408, %vm1409
  %v1411 = vsel %vm1410, %v1402, %v1407
  %v1412 = vrsqrt.pop %v1390
  %v1413 = vmul.f32 %v1412, %v1390
  %v1414 = vmul.f32 %v1413, %v1412
  %v1415 = vmul.f32 0.5, %v1414
  %v1416 = vsub.f32 1.5, %v1415
  %v1417 = vmul.f32 %v1412, %v1416
  %vm1418 = vweird.f32 %v1390
  %vm1419 = vweird.f32 %v1412
  %vm1420 = vmor %vm1418, %vm1419
  %v1421 = vsel %vm1420, %v1412, %v1417
  %v1422 = vrsqrt.pop %v1391
  %v1423 = vmul.f32 %v1422, %v1391
  %v1424 = vmul.f32 %v1423, %v1422
  %v1425 = vmul.f32 0.5, %v1424
  %v1426 = vsub.f32 1.5, %v1425
  %v1427 = vmul.f32 %v1422, %v1426
  %vm1428 = vweird.f32 %v1391
  %vm1429 = vweird.f32 %v1422
  %vm1430 = vmor %vm1428, %vm1429
  %v1431 = vsel %vm1430, %v1422, %v1427
  %v1432 = vmul.f32 %v1384, %v1401
  %v1433 = vmul.f32 %v1385, %v1411
  %v1434 = vmul.f32 %v1386, %v1421
  %v1435 = vmul.f32 %v1387, %v1431
  %v1436 = vld [vmem:[%s16] sm:$0xff]
  %v1437 = vld [vmem:[%s16 + $0x8] sm:$0xff]
  %v1438 = vld [vmem:[%s16 + $0x10] sm:$0xff]
  %v1439 = vld [vmem:[%s16 + $0x18] sm:$0xff]
  %v1440 = vmul.f32 %v1332, %v1432
  %v1441 = vmul.f32 %v1333, %v1433
  %v1442 = vmul.f32 %v1334, %v1434
  %v1443 = vmul.f32 %v1335, %v1435
  %v1444 = vsub.f32 %v1436, %v1440
  %v1445 = vsub.f32 %v1437, %v1441
  %v1446 = vsub.f32 %v1438, %v1442
  %v1447 = vsub.f32 %v1439, %v1443
  %1449 = vset.pattern.permute.xlu0 0
  %1450 = vperm.xlu0 %1449, %v1432
  %v1451 = vpop.permute.xlu0 %1450
  %1454 = vset.pattern.permute.xlu0 0
  %1455 = vperm.xlu0 %1454, %v1433
  %v1456 = vpop.permute.xlu0 %1455
  %1459 = vset.pattern.permute.xlu0 0
  %1460 = vperm.xlu0 %1459, %v1434
  %v1461 = vpop.permute.xlu0 %1460
  %1464 = vset.pattern.permute.xlu0 0
  %1465 = vperm.xlu0 %1464, %v1435
  %v1466 = vpop.permute.xlu0 %1465
  %v1468 = vmul.f32 %v1214, %v1451
  %v1469 = vmul.f32 %v1243, %v1451
  %v1470 = vmul.f32 %v1272, %v1451
  %v1471 = vmul.f32 %v1301, %v1451
  %v1472 = vmul.f32 %v1217, %v1456
  %v1473 = vmul.f32 %v1246, %v1456
  %v1474 = vmul.f32 %v1275, %v1456
  %v1475 = vmul.f32 %v1304, %v1456
  %v1476 = vmul.f32 %v1220, %v1461
  %v1477 = vmul.f32 %v1249, %v1461
  %v1478 = vmul.f32 %v1278, %v1461
  %v1479 = vmul.f32 %v1307, %v1461
  %v1480 = vmul.f32 %v1223, %v1466
  %v1481 = vmul.f32 %v1252, %v1466
  %v1482 = vmul.f32 %v1281, %v1466
  %v1483 = vmul.f32 %v1310, %v1466
  %1485 = vset.pattern.permute.xlu0 0
  %1486 = vperm.xlu0 %1485, %v1444
  %v1487 = vpop.permute.xlu0 %1486
  %1490 = vset.pattern.permute.xlu0 0
  %1491 = vperm.xlu0 %1490, %v1445
  %v1492 = vpop.permute.xlu0 %1491
  %1495 = vset.pattern.permute.xlu0 0
  %1496 = vperm.xlu0 %1495, %v1446
  %v1497 = vpop.permute.xlu0 %1496
  %1500 = vset.pattern.permute.xlu0 0
  %1501 = vperm.xlu0 %1500, %v1447
  %v1502 = vpop.permute.xlu0 %1501
  %v1504 = vadd.f32 %v1468, %v1487
  %v1505 = vadd.f32 %v1469, %v1487
  %v1506 = vadd.f32 %v1470, %v1487
  %v1507 = vadd.f32 %v1471, %v1487
  %v1508 = vadd.f32 %v1472, %v1492
  %v1509 = vadd.f32 %v1473, %v1492
  %v1510 = vadd.f32 %v1474, %v1492
  %v1511 = vadd.f32 %v1475, %v1492
  %v1512 = vadd.f32 %v1476, %v1497
  %v1513 = vadd.f32 %v1477, %v1497
  %v1514 = vadd.f32 %v1478, %v1497
  %v1515 = vadd.f32 %v1479, %v1497
  %v1516 = vadd.f32 %v1480, %v1502
  %v1517 = vadd.f32 %v1481, %v1502
  %v1518 = vadd.f32 %v1482, %v1502
  %v1519 = vadd.f32 %v1483, %v1502
  %v1520 = vadd.f32 %v768, %v1504
  %v1521 = vadd.f32 %v769, %v1505
  %v1522 = vadd.f32 %v770, %v1506
  %v1523 = vadd.f32 %v771, %v1507
  %v1524 = vadd.f32 %v772, %v1508
  %v1525 = vadd.f32 %v773, %v1509
  %v1526 = vadd.f32 %v774, %v1510
  %v1527 = vadd.f32 %v775, %v1511
  %v1528 = vadd.f32 %v776, %v1512
  %v1529 = vadd.f32 %v777, %v1513
  %v1530 = vadd.f32 %v778, %v1514
  %v1531 = vadd.f32 %v779, %v1515
  %v1532 = vadd.f32 %v780, %v1516
  %v1533 = vadd.f32 %v781, %v1517
  %v1534 = vadd.f32 %v782, %v1518
  %v1535 = vadd.f32 %v783, %v1519
  %v1536 = vmax.f32 %v1520, 0.0
  %v1537 = vmax.f32 %v1521, 0.0
  %v1538 = vmax.f32 %v1522, 0.0
  %v1539 = vmax.f32 %v1523, 0.0
  %v1540 = vmax.f32 %v1524, 0.0
  %v1541 = vmax.f32 %v1525, 0.0
  %v1542 = vmax.f32 %v1526, 0.0
  %v1543 = vmax.f32 %v1527, 0.0
  %v1544 = vmax.f32 %v1528, 0.0
  %v1545 = vmax.f32 %v1529, 0.0
  %v1546 = vmax.f32 %v1530, 0.0
  %v1547 = vmax.f32 %v1531, 0.0
  %v1548 = vmax.f32 %v1532, 0.0
  %v1549 = vmax.f32 %v1533, 0.0
  %v1550 = vmax.f32 %v1534, 0.0
  %v1551 = vmax.f32 %v1535, 0.0
  %1552 = vst [vmem:[%s17] sm:$0xff] %v1536
  %1553 = vst [vmem:[%s17 + $0x8] sm:$0xff] %v1537
  %1554 = vst [vmem:[%s17 + $0x10] sm:$0xff] %v1538
  %1555 = vst [vmem:[%s17 + $0x18] sm:$0xff] %v1539
  %1556 = vst [vmem:[%s17 + $0x20] sm:$0xff] %v1540
  %1557 = vst [vmem:[%s17 + $0x28] sm:$0xff] %v1541
  %1558 = vst [vmem:[%s17 + $0x30] sm:$0xff] %v1542
  %1559 = vst [vmem:[%s17 + $0x38] sm:$0xff] %v1543
  %1560 = vst [vmem:[%s17 + $0x40] sm:$0xff] %v1544
  %1561 = vst [vmem:[%s17 + $0x48] sm:$0xff] %v1545
  %1562 = vst [vmem:[%s17 + $0x50] sm:$0xff] %v1546
  %1563 = vst [vmem:[%s17 + $0x58] sm:$0xff] %v1547
  %1564 = vst [vmem:[%s17 + $0x60] sm:$0xff] %v1548
  %1565 = vst [vmem:[%s17 + $0x68] sm:$0xff] %v1549
  %1566 = vst [vmem:[%s17 + $0x70] sm:$0xff] %v1550
  %1567 = vst [vmem:[%s17 + $0x78] sm:$0xff] %v1551
  // Predicated region
  $region70: #{upsample_block.1} parent=0 // pred_check
    _
  $region71: #{upsample_block.1} parent=0 // pred_check_branch
    %1569 = sbr.rel (0) target = $region73
  $region72: #{upsample_block.1} parent=0 // pred_region
    _
  $region73: #{upsample_block.1} parent=0 // pred_fallthru
    _
  // Predicated region
  $region74: #{upsample_block.1} parent=0 // pred_check
    _
  $region75: #{upsample_block.1} parent=0 // pred_check_branch
    %1571 = sbr.rel (0) target = $region77
  $region76: #{upsample_block.1} parent=0 // pred_region
    _
  $region77: #{upsample_block.1} parent=0 // pred_fallthru
    _

</llo_original>
